<compile_context>
chip_gen: v5e
topology: v5e:2x2
jax: 0.10.0
libtpu: 0.0.40
codegen_flags: <defaults>
</compile_context>

<pallas_src>
import math
import functools

import jax
import jax.numpy as jnp
from jax import lax
from jax.experimental import pallas as pl
from jax.experimental.pallas import tpu as pltpu


def _round_up(x, m):
    return ((x + m - 1) // m) * m


def _vmem_capacity_bytes():
    try:
        return int(pltpu.get_tpu_info().vmem_capacity_bytes)
    except Exception:
        # Conservative default (v7x per-TC VMEM) if the query is unavailable.
        return 64 * 1024 * 1024


# ----------------------------------------------------------------------------
# Fused kernel: transform (dense + gelu + LayerNorm) + vocab decoder.
# Grid: (cdiv(M, TM), cdiv(Vp, TV)), V innermost.
# ----------------------------------------------------------------------------
def _lm_head_kernel(x_ref, dw_ref, db_ref, gamma_ref, beta_ref,
                    decw_ref, decb_ref, o_ref, h_ref, *, eps):
    # x_ref:    (TM, H)   activation rows for this M block (compute dtype)
    # dw_ref:   (H, H)    transform.dense weight, (in, out) (compute dtype)
    # db_ref / gamma_ref / beta_ref: (1, H) f32
    # decw_ref: (H, TV)   decoder weight slab, (in, out) (compute dtype)
    # decb_ref: (1, TV)   vocab bias slab f32
    # o_ref:    (TM, TV)  logits tile (activation dtype)
    # h_ref:    (TM, H)   VMEM scratch holding the transformed activations

    # --- transform once per M-row block (first vocab tile only) ---
    @pl.when(pl.program_id(1) == 0)
    def _():
        # Native (bf16) operands into the MXU, f32 accumulator.
        h = jnp.dot(x_ref[...], dw_ref[...],
                    preferred_element_type=jnp.float32)
        h = h + db_ref[...].astype(jnp.float32)

        # gelu (erf formulation, exactly as in the PyTorch reference).
        h = h * 0.5 * (1.0 + lax.erf(h * (1.0 / math.sqrt(2.0))))

        # LayerNorm over last dim (biased variance, like torch.nn.LayerNorm).
        mean = jnp.mean(h, axis=-1, keepdims=True)
        centered = h - mean
        var = jnp.mean(centered * centered, axis=-1, keepdims=True)
        h = centered * lax.rsqrt(var + eps)
        h = (h * gamma_ref[...].astype(jnp.float32)
             + beta_ref[...].astype(jnp.float32))

        # Store in the compute dtype so the decoder matmul gets the bf16
        # full-rate MXU path.
        h_ref[...] = h.astype(h_ref.dtype)

    # --- decoder tile: (TM, H) @ (H, TV) + vocab bias ---
    out = jnp.dot(h_ref[...], decw_ref[...],
                  preferred_element_type=jnp.float32)
    out = out + decb_ref[...].astype(jnp.float32)
    o_ref[...] = out.astype(o_ref.dtype)


# ----------------------------------------------------------------------------
# Wrapper
# ----------------------------------------------------------------------------
def bert_lm_prediction_head(
    hidden_states,          # [B, S, H]
    dense_w,                # [H, H]  (in, out)
    dense_b,                # [H]
    ln_gamma,               # [H]
    ln_beta,                # [H]
    decoder_w,              # [H, V]  (in, out)
    decoder_bias,           # [V]
    *,
    eps=1e-12,
    row_tile=None,          # TM; default chosen per TPU generation
    vocab_tile=None,        # TV; default 2048
    compute_dtype=jnp.bfloat16,   # MXU operand dtype (f32 accumulation)
):
    B, S, H = hidden_states.shape
    V = decoder_w.shape[1]
    M = B * S
    out_dtype = hidden_states.dtype

    # ---- per-generation tiling / VMEM budget ----
    vmem_cap = _vmem_capacity_bytes()
    small_vmem = vmem_cap < 100 * 1024 * 1024        # v7x-class (64 MiB / TC)
    if row_tile is None:
        row_tile = 512 if small_vmem else 1024
    if vocab_tile is None:
        vocab_tile = 2048
    row_tile = max(8, _round_up(row_tile, 8))
    vocab_tile = max(128, _round_up(vocab_tile, 128))
    vmem_limit = min(48 * 1024 * 1024 if small_vmem else 100 * 1024 * 1024,
                     int(vmem_cap * 0.9))

    # Row tile: biggest that fits, but on v7x keep grid_m >= 2 so both
    # TensorCores get work along the "parallel" M axis.
    if M <= 8:
        tm = M
    elif M <= row_tile:
        if small_vmem:
            tm = min(_round_up(-(-M // 2), 8), M)   # ~M/2, 8-aligned
        else:
            tm = M
    else:
        tm = row_tile

    # Vocab: pad to a multiple of 128 so every tile (including the tail) is
    # lane-dense; slice the pad columns off after the call.
    Vp = _round_up(V, 128)
    tv = Vp if Vp <= vocab_tile else vocab_tile
    grid_m = pl.cdiv(M, tm)
    grid_v = pl.cdiv(Vp, tv)

    if Vp != V:
        decoder_w = jnp.pad(decoder_w, ((0, 0), (0, Vp - V)))
        decoder_bias = jnp.pad(decoder_bias, (0, Vp - V))

    # ---- operand casts: bf16 MXU operands, f32 per-element params ----
    x = hidden_states.reshape(M, H).astype(compute_dtype)
    dw = dense_w.astype(compute_dtype)
    decw = decoder_w.astype(compute_dtype)
    db2 = dense_b.reshape(1, H).astype(jnp.float32)
    g2 = ln_gamma.reshape(1, H).astype(jnp.float32)
    b2 = ln_beta.reshape(1, H).astype(jnp.float32)
    decb2 = decoder_bias.reshape(1, Vp).astype(jnp.float32)

    cdt = jnp.dtype(compute_dtype).itemsize
    odt = jnp.dtype(out_dtype).itemsize
    cost = pl.CostEstimate(
        flops=2 * M * H * H + 2 * M * H * Vp,
        transcendentals=M * H,
        bytes_accessed=(
            M * H * cdt                    # activations
            + H * H * cdt                  # dense W (resident)
            + grid_m * H * Vp * cdt        # decoder W, re-streamed per M block
            + grid_m * Vp * 4              # vocab bias
            + M * Vp * odt                 # logits writeback
        ),
    )

    def _const_spec(block_shape, single_buffer):
        index_map = lambda i, j: (0,) * len(block_shape)
        if single_buffer:
            try:
                # Grid-constant block: single buffer, no wasted VMEM.
                return pl.BlockSpec(block_shape, index_map,
                                    pipeline_mode=pl.Buffered(1))
            except TypeError:
                pass
        return pl.BlockSpec(block_shape, index_map)

    def _run(single_buffer_consts):
        in_specs = [
            pl.BlockSpec((tm, H), lambda i, j: (i, 0)),       # x rows
            _const_spec((H, H), single_buffer_consts),        # dense W
            _const_spec((1, H), single_buffer_consts),        # dense b
            _const_spec((1, H), single_buffer_consts),        # LN gamma
            _const_spec((1, H), single_buffer_consts),        # LN beta
            pl.BlockSpec((H, tv), lambda i, j: (0, j)),       # decoder W slab
            pl.BlockSpec((1, tv), lambda i, j: (0, j)),       # vocab bias slab
        ]
        return pl.pallas_call(
            functools.partial(_lm_head_kernel, eps=eps),
            out_shape=jax.ShapeDtypeStruct((M, Vp), out_dtype),
            grid_spec=pltpu.PrefetchScalarGridSpec(
                num_scalar_prefetch=0,
                grid=(grid_m, grid_v),
                in_specs=in_specs,
                out_specs=pl.BlockSpec((tm, tv), lambda i, j: (i, j)),
                scratch_shapes=[pltpu.VMEM((tm, H), compute_dtype)],
            ),
            compiler_params=pltpu.CompilerParams(
                # M across megacore TCs; V must stay sequential (scratch reuse).
                dimension_semantics=("parallel", "arbitrary"),
                vmem_limit_bytes=vmem_limit,
            ),
            cost_estimate=cost,
        )(x, dw, db2, g2, b2, decw, decb2)

    try:
        logits = _run(True)
    except Exception:
        # pipeline_mode / Buffered(1) unsupported on this build: fall back to
        # default double-buffered constants (correct, slightly more VMEM).
        logits = _run(False)

    if Vp != V:
        logits = logits[:, :V]
    return logits.reshape(B, S, V)


# ----------------------------------------------------------------------------
# Pure-JAX references for sanity checks
# ----------------------------------------------------------------------------
def _reference_f32(x, dense_w, dense_b, gamma, beta, dec_w, dec_b, eps=1e-12):
    h = x @ dense_w + dense_b
    h = h * 0.5 * (1.0 + lax.erf(h / math.sqrt(2.0)))
    mean = jnp.mean(h, axis=-1, keepdims=True)
    var = jnp.mean((h - mean) ** 2, axis=-1, keepdims=True)
    h = (h - mean) * lax.rsqrt(var + eps) * gamma + beta
    return h @ dec_w + dec_b


def _reference_mixed(x, dense_w, dense_b, gamma, beta, dec_w, dec_b,
                     eps=1e-12, compute_dtype=jnp.bfloat16):
    # Mimics the kernel's precision: bf16 MXU operands, f32 accumulation,
    # f32 gelu/LayerNorm, bf16 h before the decoder matmul.
    h = jnp.dot(x.astype(compute_dtype), dense_w.astype(compute_dtype),
                preferred_element_type=jnp.float32) + dense_b
    h = h * 0.5 * (1.0 + lax.erf(h / math.sqrt(2.0)))
    mean = jnp.mean(h, axis=-1, keepdims=True)
    var = jnp.mean((h - mean) ** 2, axis=-1, keepdims=True)
    h = (h - mean) * lax.rsqrt(var + eps) * gamma + beta
    h = h.astype(compute_dtype)
    return jnp.dot(h, dec_w.astype(compute_dtype),
                   preferred_element_type=jnp.float32) + dec_b


if __name__ == "__main__":
    # Small, BERT-like config: batch=2, seq=8, hidden=128, vocab=512.
    B, S, H, V = 2, 8, 128, 512

    key = jax.random.PRNGKey(0)
    k_x, k_dw, k_db, k_g, k_b, k_decw, k_decb = jax.random.split(key, 7)

    x = jax.random.normal(k_x, (B, S, H), dtype=jnp.float32)

    # Deterministic parameter init (shapes per the module's __init__).
    dense_w = jax.random.normal(k_dw, (H, H), dtype=jnp.float32) * 0.02
    dense_b = jax.random.normal(k_db, (H,), dtype=jnp.float32) * 0.02
    ln_gamma = jnp.ones((H,), dtype=jnp.float32) + \
        0.01 * jax.random.normal(k_g, (H,), dtype=jnp.float32)
    ln_beta = 0.01 * jax.random.normal(k_b, (H,), dtype=jnp.float32)
    decoder_w = jax.random.normal(k_decw, (H, V), dtype=jnp.float32) * 0.02
    decoder_bias = 0.01 * jax.random.normal(k_decb, (V,), dtype=jnp.float32)

    out = bert_lm_prediction_head(
        x, dense_w, dense_b, ln_gamma, ln_beta, decoder_w, decoder_bias)
    out = jax.block_until_ready(out)
    assert out.shape == (B, S, V)

    x2 = x.reshape(B * S, H)
    ref_mixed = _reference_mixed(x2, dense_w, dense_b, ln_gamma, ln_beta,
                                 decoder_w, decoder_bias).reshape(B, S, V)
    ref_f32 = _reference_f32(x2, dense_w, dense_b, ln_gamma, ln_beta,
                             decoder_w, decoder_bias).reshape(B, S, V)

    # Tight check vs a reference matching the kernel's bf16/f32 mixed precision.
    assert jnp.allclose(out, ref_mixed, atol=1e-2, rtol=1e-2), \
        "mismatch vs mixed-precision reference"
    # Loose check vs the exact fp32 PyTorch-equivalent math (bf16 MXU rounding).
    assert jnp.allclose(out, ref_f32, atol=5e-2, rtol=5e-2), \
        "mismatch vs fp32 reference"
    print("KERNEL_OK")
</pallas_src>

<mosaic_0001>
module attributes {stable_mosaic.version = 11 : i64} {
  func.func @_lm_head_kernel(%arg0: i32, %arg1: i32, %arg2: memref<8x128xbf16, #tpu.memory_space<vmem>>, %arg3: memref<128x128xbf16, #tpu.memory_space<vmem>>, %arg4: memref<1x128xf32, #tpu.memory_space<vmem>>, %arg5: memref<1x128xf32, #tpu.memory_space<vmem>>, %arg6: memref<1x128xf32, #tpu.memory_space<vmem>>, %arg7: memref<128x512xbf16, #tpu.memory_space<vmem>>, %arg8: memref<1x512xf32, #tpu.memory_space<vmem>>, %arg9: memref<8x512xf32, #tpu.memory_space<vmem>>, %arg10: memref<8x128xbf16, #tpu.memory_space<vmem>>) attributes {dimension_semantics = [#tpu.dimension_semantics<parallel>, #tpu.dimension_semantics<arbitrary>], iteration_bounds = array<i64: 2, 1>, scalar_prefetch = 0 : i64, scratch_operands = 1 : i64, tpu.core_type = #tpu.core_type<tc>, window_params = [{transform_indices = @transform_0, window_bounds = array<i64: 8, 128>}, {pipeline_mode = #tpu.pipeline_mode<synchronous>, transform_indices = @transform_1, window_bounds = array<i64: 128, 128>}, {pipeline_mode = #tpu.pipeline_mode<synchronous>, transform_indices = @transform_2, window_bounds = array<i64: 1, 128>}, {pipeline_mode = #tpu.pipeline_mode<synchronous>, transform_indices = @transform_3, window_bounds = array<i64: 1, 128>}, {pipeline_mode = #tpu.pipeline_mode<synchronous>, transform_indices = @transform_4, window_bounds = array<i64: 1, 128>}, {transform_indices = @transform_5, window_bounds = array<i64: 128, 512>}, {transform_indices = @transform_6, window_bounds = array<i64: 1, 512>}, {transform_indices = @transform_7, window_bounds = array<i64: 8, 512>}]} {
    %c0_i32 = arith.constant 0 : i32
    %0 = arith.cmpi eq, %arg1, %c0_i32 : i32
    %1 = arith.extui %0 : i1 to i32
    %c0_i32_0 = arith.constant 0 : i32
    %2 = arith.cmpi ne, %1, %c0_i32_0 : i32
    scf.if %2 {
      %c0_8 = arith.constant 0 : index
      %c0_9 = arith.constant 0 : index
      %10 = vector.load %arg2[%c0_8, %c0_9] : memref<8x128xbf16, #tpu.memory_space<vmem>>, vector<8x128xbf16>
      %c0_10 = arith.constant 0 : index
      %c0_11 = arith.constant 0 : index
      %11 = vector.load %arg3[%c0_10, %c0_11] : memref<128x128xbf16, #tpu.memory_space<vmem>>, vector<128x128xbf16>
      %cst_12 = arith.constant dense<0.000000e+00> : vector<8x128xf32>
      %12 = tpu.matmul %10, %11, %cst_12 {dimension_numbers = #tpu.dot_dimension_numbers<[1], [0], [0], [1], [0, 0, 1, 1], [], []>} : vector<8x128xbf16>, vector<128x128xbf16>, vector<8x128xf32> -> vector<8x128xf32>
      %c0_13 = arith.constant 0 : index
      %c0_14 = arith.constant 0 : index
      %13 = vector.load %arg4[%c0_13, %c0_14] : memref<1x128xf32, #tpu.memory_space<vmem>>, vector<1x128xf32>
      %14 = vector.broadcast %13 : vector<1x128xf32> to vector<8x128xf32>
      %15 = arith.addf %12, %14 : vector<8x128xf32>
      %cst_15 = arith.constant 5.000000e-01 : f32
      %16 = vector.broadcast %cst_15 : f32 to vector<8x128xf32>
      %17 = arith.mulf %15, %16 : vector<8x128xf32>
      %cst_16 = arith.constant 0.707106769 : f32
      %18 = vector.broadcast %cst_16 : f32 to vector<8x128xf32>
      %19 = arith.mulf %15, %18 : vector<8x128xf32>
      %20 = math.erf %19 : vector<8x128xf32>
      %cst_17 = arith.constant 1.000000e+00 : f32
      %21 = vector.broadcast %cst_17 : f32 to vector<8x128xf32>
      %22 = arith.addf %21, %20 : vector<8x128xf32>
      %23 = arith.mulf %17, %22 : vector<8x128xf32>
      %cst_18 = arith.constant dense<0.000000e+00> : vector<8xf32>
      %24 = vector.multi_reduction <add>, %23, %cst_18 [1] : vector<8x128xf32> to vector<8xf32>
      %25 = vector.shape_cast %24 : vector<8xf32> to vector<8x1xf32>
      %cst_19 = arith.constant 1.280000e+02 : f32
      %26 = vector.broadcast %cst_19 : f32 to vector<8x1xf32>
      %27 = arith.divf %25, %26 : vector<8x1xf32>
      %28 = vector.broadcast %27 : vector<8x1xf32> to vector<8x128xf32>
      %29 = arith.subf %23, %28 : vector<8x128xf32>
      %30 = arith.mulf %29, %29 : vector<8x128xf32>
      %cst_20 = arith.constant dense<0.000000e+00> : vector<8xf32>
      %31 = vector.multi_reduction <add>, %30, %cst_20 [1] : vector<8x128xf32> to vector<8xf32>
      %32 = vector.shape_cast %31 : vector<8xf32> to vector<8x1xf32>
      %cst_21 = arith.constant 1.280000e+02 : f32
      %33 = vector.broadcast %cst_21 : f32 to vector<8x1xf32>
      %34 = arith.divf %32, %33 : vector<8x1xf32>
      %cst_22 = arith.constant 9.99999996E-13 : f32
      %35 = vector.broadcast %cst_22 : f32 to vector<8x1xf32>
      %36 = arith.addf %34, %35 : vector<8x1xf32>
      %37 = math.rsqrt %36 : vector<8x1xf32>
      %38 = vector.broadcast %37 : vector<8x1xf32> to vector<8x128xf32>
      %39 = arith.mulf %29, %38 : vector<8x128xf32>
      %c0_23 = arith.constant 0 : index
      %c0_24 = arith.constant 0 : index
      %40 = vector.load %arg5[%c0_23, %c0_24] : memref<1x128xf32, #tpu.memory_space<vmem>>, vector<1x128xf32>
      %41 = vector.broadcast %40 : vector<1x128xf32> to vector<8x128xf32>
      %42 = arith.mulf %39, %41 : vector<8x128xf32>
      %c0_25 = arith.constant 0 : index
      %c0_26 = arith.constant 0 : index
      %43 = vector.load %arg6[%c0_25, %c0_26] : memref<1x128xf32, #tpu.memory_space<vmem>>, vector<1x128xf32>
      %44 = vector.broadcast %43 : vector<1x128xf32> to vector<8x128xf32>
      %45 = arith.addf %42, %44 : vector<8x128xf32>
      %46 = arith.truncf %45 : vector<8x128xf32> to vector<8x128xbf16>
      %c0_27 = arith.constant 0 : index
      %c0_28 = arith.constant 0 : index
      %47 = vector.load %arg10[%c0_27, %c0_28] : memref<8x128xbf16, #tpu.memory_space<vmem>>, vector<8x128xbf16>
      tpu.vector_store %arg10[%c0_27, %c0_28], %46 {strides = array<i32>} : memref<8x128xbf16, #tpu.memory_space<vmem>>, vector<8x128xbf16>,
    } else {
    }
    %c0 = arith.constant 0 : index
    %c0_1 = arith.constant 0 : index
    %3 = vector.load %arg10[%c0, %c0_1] : memref<8x128xbf16, #tpu.memory_space<vmem>>, vector<8x128xbf16>
    %c0_2 = arith.constant 0 : index
    %c0_3 = arith.constant 0 : index
    %4 = vector.load %arg7[%c0_2, %c0_3] : memref<128x512xbf16, #tpu.memory_space<vmem>>, vector<128x512xbf16>
    %cst = arith.constant dense<0.000000e+00> : vector<8x512xf32>
    %5 = tpu.matmul %3, %4, %cst {dimension_numbers = #tpu.dot_dimension_numbers<[1], [0], [0], [1], [0, 0, 1, 1], [], []>} : vector<8x128xbf16>, vector<128x512xbf16>, vector<8x512xf32> -> vector<8x512xf32>
    %c0_4 = arith.constant 0 : index
    %c0_5 = arith.constant 0 : index
    %6 = vector.load %arg8[%c0_4, %c0_5] : memref<1x512xf32, #tpu.memory_space<vmem>>, vector<1x512xf32>
    %7 = vector.broadcast %6 : vector<1x512xf32> to vector<8x512xf32>
    %8 = arith.addf %5, %7 : vector<8x512xf32>
    %c0_6 = arith.constant 0 : index
    %c0_7 = arith.constant 0 : index
    %9 = vector.load %arg9[%c0_6, %c0_7] : memref<8x512xf32, #tpu.memory_space<vmem>>, vector<8x512xf32>
    tpu.vector_store %arg9[%c0_6, %c0_7], %8 {strides = array<i32>} : memref<8x512xf32, #tpu.memory_space<vmem>>, vector<8x512xf32>,
    return
  }
  func.func @transform_0(%arg0: i32, %arg1: i32) -> (i32, i32) {
    %c0_i32 = arith.constant 0 : i32
    %c0_i32_0 = arith.constant 0 : i32
    return %arg0, %c0_i32 : i32, i32
  }
  func.func @transform_1(%arg0: i32, %arg1: i32) -> (i32, i32) {
    %c0_i32 = arith.constant 0 : i32
    %c0_i32_0 = arith.constant 0 : i32
    %c0_i32_1 = arith.constant 0 : i32
    return %c0_i32, %c0_i32_0 : i32, i32
  }
  func.func @transform_2(%arg0: i32, %arg1: i32) -> (i32, i32) {
    %c0_i32 = arith.constant 0 : i32
    %c0_i32_0 = arith.constant 0 : i32
    %c0_i32_1 = arith.constant 0 : i32
    return %c0_i32, %c0_i32_0 : i32, i32
  }
  func.func @transform_3(%arg0: i32, %arg1: i32) -> (i32, i32) {
    %c0_i32 = arith.constant 0 : i32
    %c0_i32_0 = arith.constant 0 : i32
    %c0_i32_1 = arith.constant 0 : i32
    return %c0_i32, %c0_i32_0 : i32, i32
  }
  func.func @transform_4(%arg0: i32, %arg1: i32) -> (i32, i32) {
    %c0_i32 = arith.constant 0 : i32
    %c0_i32_0 = arith.constant 0 : i32
    %c0_i32_1 = arith.constant 0 : i32
    return %c0_i32, %c0_i32_0 : i32, i32
  }
  func.func @transform_5(%arg0: i32, %arg1: i32) -> (i32, i32) {
    %c0_i32 = arith.constant 0 : i32
    %c0_i32_0 = arith.constant 0 : i32
    return %c0_i32, %arg1 : i32, i32
  }
  func.func @transform_6(%arg0: i32, %arg1: i32) -> (i32, i32) {
    %c0_i32 = arith.constant 0 : i32
    %c0_i32_0 = arith.constant 0 : i32
    return %c0_i32, %arg1 : i32, i32
  }
  func.func @transform_7(%arg0: i32, %arg1: i32) -> (i32, i32) {
    %c0_i32 = arith.constant 0 : i32
    return %arg0, %arg1 : i32, i32
  }
}

module attributes {stable_mosaic.version = 11 : i64} {
  func.func @_lm_head_kernel(%arg0: i32, %arg1: i32, %arg2: memref<8x128xbf16, #tpu.memory_space<vmem>>, %arg3: memref<128x128xbf16, #tpu.memory_space<vmem>>, %arg4: memref<1x128xf32, #tpu.memory_space<vmem>>, %arg5: memref<1x128xf32, #tpu.memory_space<vmem>>, %arg6: memref<1x128xf32, #tpu.memory_space<vmem>>, %arg7: memref<128x512xbf16, #tpu.memory_space<vmem>>, %arg8: memref<1x512xf32, #tpu.memory_space<vmem>>, %arg9: memref<8x512xf32, #tpu.memory_space<vmem>>, %arg10: memref<8x128xbf16, #tpu.memory_space<vmem>>) attributes {dimension_semantics = [#tpu.dimension_semantics<parallel>, #tpu.dimension_semantics<arbitrary>], iteration_bounds = array<i64: 2, 1>, scalar_prefetch = 0 : i64, scratch_operands = 1 : i64, tpu.core_type = #tpu.core_type<tc>, window_params = [{transform_indices = @transform_0, window_bounds = array<i64: 8, 128>}, {pipeline_mode = #tpu.pipeline_mode<synchronous>, transform_indices = @transform_1, window_bounds = array<i64: 128, 128>}, {pipeline_mode = #tpu.pipeline_mode<synchronous>, transform_indices = @transform_2, window_bounds = array<i64: 1, 128>}, {pipeline_mode = #tpu.pipeline_mode<synchronous>, transform_indices = @transform_3, window_bounds = array<i64: 1, 128>}, {pipeline_mode = #tpu.pipeline_mode<synchronous>, transform_indices = @transform_4, window_bounds = array<i64: 1, 128>}, {transform_indices = @transform_5, window_bounds = array<i64: 128, 512>}, {transform_indices = @transform_6, window_bounds = array<i64: 1, 512>}, {transform_indices = @transform_7, window_bounds = array<i64: 8, 512>}]} {
    %c0_i32 = arith.constant 0 : i32
    %0 = arith.cmpi eq, %arg1, %c0_i32 : i32
    %1 = arith.extui %0 : i1 to i32
    %c0_i32_0 = arith.constant 0 : i32
    %2 = arith.cmpi ne, %1, %c0_i32_0 : i32
    scf.if %2 {
      %c0_8 = arith.constant 0 : index
      %c0_9 = arith.constant 0 : index
      %10 = vector.load %arg2[%c0_8, %c0_9] : memref<8x128xbf16, #tpu.memory_space<vmem>>, vector<8x128xbf16>
      %c0_10 = arith.constant 0 : index
      %c0_11 = arith.constant 0 : index
      %11 = vector.load %arg3[%c0_10, %c0_11] : memref<128x128xbf16, #tpu.memory_space<vmem>>, vector<128x128xbf16>
      %cst_12 = arith.constant dense<0.000000e+00> : vector<8x128xf32>
      %12 = tpu.matmul %10, %11, %cst_12 {dimension_numbers = #tpu.dot_dimension_numbers<[1], [0], [0], [1], [0, 0, 1, 1], [], []>} : vector<8x128xbf16>, vector<128x128xbf16>, vector<8x128xf32> -> vector<8x128xf32>
      %c0_13 = arith.constant 0 : index
      %c0_14 = arith.constant 0 : index
      %13 = vector.load %arg4[%c0_13, %c0_14] : memref<1x128xf32, #tpu.memory_space<vmem>>, vector<1x128xf32>
      %14 = vector.broadcast %13 : vector<1x128xf32> to vector<8x128xf32>
      %15 = arith.addf %12, %14 : vector<8x128xf32>
      %cst_15 = arith.constant 5.000000e-01 : f32
      %16 = vector.broadcast %cst_15 : f32 to vector<8x128xf32>
      %17 = arith.mulf %15, %16 : vector<8x128xf32>
      %cst_16 = arith.constant 0.707106769 : f32
      %18 = vector.broadcast %cst_16 : f32 to vector<8x128xf32>
      %19 = arith.mulf %15, %18 : vector<8x128xf32>
      %20 = math.erf %19 : vector<8x128xf32>
      %cst_17 = arith.constant 1.000000e+00 : f32
      %21 = vector.broadcast %cst_17 : f32 to vector<8x128xf32>
      %22 = arith.addf %21, %20 : vector<8x128xf32>
      %23 = arith.mulf %17, %22 : vector<8x128xf32>
      %cst_18 = arith.constant dense<0.000000e+00> : vector<8xf32>
      %24 = vector.multi_reduction <add>, %23, %cst_18 [1] : vector<8x128xf32> to vector<8xf32>
      %25 = vector.shape_cast %24 : vector<8xf32> to vector<8x1xf32>
      %cst_19 = arith.constant 1.280000e+02 : f32
      %26 = vector.broadcast %cst_19 : f32 to vector<8x1xf32>
      %27 = arith.divf %25, %26 : vector<8x1xf32>
      %28 = vector.broadcast %27 : vector<8x1xf32> to vector<8x128xf32>
      %29 = arith.subf %23, %28 : vector<8x128xf32>
      %30 = arith.mulf %29, %29 : vector<8x128xf32>
      %cst_20 = arith.constant dense<0.000000e+00> : vector<8xf32>
      %31 = vector.multi_reduction <add>, %30, %cst_20 [1] : vector<8x128xf32> to vector<8xf32>
      %32 = vector.shape_cast %31 : vector<8xf32> to vector<8x1xf32>
      %cst_21 = arith.constant 1.280000e+02 : f32
      %33 = vector.broadcast %cst_21 : f32 to vector<8x1xf32>
      %34 = arith.divf %32, %33 : vector<8x1xf32>
      %cst_22 = arith.constant 9.99999996E-13 : f32
      %35 = vector.broadcast %cst_22 : f32 to vector<8x1xf32>
      %36 = arith.addf %34, %35 : vector<8x1xf32>
      %37 = math.rsqrt %36 : vector<8x1xf32>
      %38 = vector.broadcast %37 : vector<8x1xf32> to vector<8x128xf32>
      %39 = arith.mulf %29, %38 : vector<8x128xf32>
      %c0_23 = arith.constant 0 : index
      %c0_24 = arith.constant 0 : index
      %40 = vector.load %arg5[%c0_23, %c0_24] : memref<1x128xf32, #tpu.memory_space<vmem>>, vector<1x128xf32>
      %41 = vector.broadcast %40 : vector<1x128xf32> to vector<8x128xf32>
      %42 = arith.mulf %39, %41 : vector<8x128xf32>
      %c0_25 = arith.constant 0 : index
      %c0_26 = arith.constant 0 : index
      %43 = vector.load %arg6[%c0_25, %c0_26] : memref<1x128xf32, #tpu.memory_space<vmem>>, vector<1x128xf32>
      %44 = vector.broadcast %43 : vector<1x128xf32> to vector<8x128xf32>
      %45 = arith.addf %42, %44 : vector<8x128xf32>
      %46 = arith.truncf %45 : vector<8x128xf32> to vector<8x128xbf16>
      %c0_27 = arith.constant 0 : index
      %c0_28 = arith.constant 0 : index
      %47 = vector.load %arg10[%c0_27, %c0_28] : memref<8x128xbf16, #tpu.memory_space<vmem>>, vector<8x128xbf16>
      tpu.vector_store %arg10[%c0_27, %c0_28], %46 {strides = array<i32>} : memref<8x128xbf16, #tpu.memory_space<vmem>>, vector<8x128xbf16>,
    } else {
    }
    %c0 = arith.constant 0 : index
    %c0_1 = arith.constant 0 : index
    %3 = vector.load %arg10[%c0, %c0_1] : memref<8x128xbf16, #tpu.memory_space<vmem>>, vector<8x128xbf16>
    %c0_2 = arith.constant 0 : index
    %c0_3 = arith.constant 0 : index
    %4 = vector.load %arg7[%c0_2, %c0_3] : memref<128x512xbf16, #tpu.memory_space<vmem>>, vector<128x512xbf16>
    %cst = arith.constant dense<0.000000e+00> : vector<8x512xf32>
    %5 = tpu.matmul %3, %4, %cst {dimension_numbers = #tpu.dot_dimension_numbers<[1], [0], [0], [1], [0, 0, 1, 1], [], []>} : vector<8x128xbf16>, vector<128x512xbf16>, vector<8x512xf32> -> vector<8x512xf32>
    %c0_4 = arith.constant 0 : index
    %c0_5 = arith.constant 0 : index
    %6 = vector.load %arg8[%c0_4, %c0_5] : memref<1x512xf32, #tpu.memory_space<vmem>>, vector<1x512xf32>
    %7 = vector.broadcast %6 : vector<1x512xf32> to vector<8x512xf32>
    %8 = arith.addf %5, %7 : vector<8x512xf32>
    %c0_6 = arith.constant 0 : index
    %c0_7 = arith.constant 0 : index
    %9 = vector.load %arg9[%c0_6, %c0_7] : memref<8x512xf32, #tpu.memory_space<vmem>>, vector<8x512xf32>
    tpu.vector_store %arg9[%c0_6, %c0_7], %8 {strides = array<i32>} : memref<8x512xf32, #tpu.memory_space<vmem>>, vector<8x512xf32>,
    return
  }
  func.func @transform_0(%arg0: i32, %arg1: i32) -> (i32, i32) {
    %c0_i32 = arith.constant 0 : i32
    %c0_i32_0 = arith.constant 0 : i32
    return %arg0, %c0_i32 : i32, i32
  }
  func.func @transform_1(%arg0: i32, %arg1: i32) -> (i32, i32) {
    %c0_i32 = arith.constant 0 : i32
    %c0_i32_0 = arith.constant 0 : i32
    %c0_i32_1 = arith.constant 0 : i32
    return %c0_i32, %c0_i32_0 : i32, i32
  }
  func.func @transform_2(%arg0: i32, %arg1: i32) -> (i32, i32) {
    %c0_i32 = arith.constant 0 : i32
    %c0_i32_0 = arith.constant 0 : i32
    %c0_i32_1 = arith.constant 0 : i32
    return %c0_i32, %c0_i32_0 : i32, i32
  }
  func.func @transform_3(%arg0: i32, %arg1: i32) -> (i32, i32) {
    %c0_i32 = arith.constant 0 : i32
    %c0_i32_0 = arith.constant 0 : i32
    %c0_i32_1 = arith.constant 0 : i32
    return %c0_i32, %c0_i32_0 : i32, i32
  }
  func.func @transform_4(%arg0: i32, %arg1: i32) -> (i32, i32) {
    %c0_i32 = arith.constant 0 : i32
    %c0_i32_0 = arith.constant 0 : i32
    %c0_i32_1 = arith.constant 0 : i32
    return %c0_i32, %c0_i32_0 : i32, i32
  }
  func.func @transform_5(%arg0: i32, %arg1: i32) -> (i32, i32) {
    %c0_i32 = arith.constant 0 : i32
    %c0_i32_0 = arith.constant 0 : i32
    return %c0_i32, %arg1 : i32, i32
  }
  func.func @transform_6(%arg0: i32, %arg1: i32) -> (i32, i32) {
    %c0_i32 = arith.constant 0 : i32
    %c0_i32_0 = arith.constant 0 : i32
    return %c0_i32, %arg1 : i32, i32
  }
  func.func @transform_7(%arg0: i32, %arg1: i32) -> (i32, i32) {
    %c0_i32 = arith.constant 0 : i32
    return %arg0, %arg1 : i32, i32
  }
}

</mosaic_0001>

<llo_original>
// kernel: tpu_custom_call.1
$region0: #{tpu_custom_call.1}
  #allocation0 [shape = 'u32[]', space=smem, size = 0x4, offset = 0x4, fixed_abs, tag = 'smem constant byte address 0x4 - core index']
  #allocation1 [shape = 'u32[72,128]{1,0:T(1,128)}', space=vmem, size = 0x9000, scoped, tag = 'internal scratch']
  #allocation2 [shape = 'bf16[8,128]{1,0:T(8,128)(2,1)}', space=vmem, size = 0x800, scoped, tag = 'scratch operand']
  %s0 = inlined_call_operand.hbm [shape: bf16[16,128], index: 0, kind: input, shape index: {}]
  %s1 = inlined_call_operand.hbm [shape: bf16[128,128], index: 1, kind: input, shape index: {}]
  %s2 = inlined_call_operand.vmem [shape: f32[1,128], index: 2, kind: input, shape index: {}]
  %s3 = inlined_call_operand.hbm [shape: f32[1,128], index: 3, kind: input, shape index: {}]
  %s4 = inlined_call_operand.hbm [shape: f32[1,128], index: 4, kind: input, shape index: {}]
  %s5 = inlined_call_operand.hbm [shape: bf16[128,512], index: 5, kind: input, shape index: {}]
  %s6 = inlined_call_operand.vmem [shape: f32[1,512], index: 6, kind: input, shape index: {}]
  %s7 = inlined_call_operand.hbm [shape: f32[16,512], index: 7, kind: output, shape index: {}]
  %s8 = sld [smem:[#allocation0]]
  $region85: #{tpu_custom_call.1} parent=0
    _
  %s10 = ssub.s32 1, %s8
  %s11 = scalar_select 0, %s10, %s8
  $region1: #{tpu_custom_call.1} parent=0
    #allocation3 [shape = 'u8[4096]{0}', space=vmem, size = 0x1000, scoped, tag = 'input window, operand 0']
    #allocation4 [shape = 's32[2]{0}', space=sflag, size = 0x8, scoped, tag = 'scoped memory for tpu_custom_call.1']
    #allocation5 [shape = 's32[2]{0}', space=sflag, size = 0x8, scoped, tag = 'scoped memory for tpu_custom_call.1']
    #allocation6 [shape = 'u8[32768]{0}', space=vmem, size = 0x8000, scoped, tag = 'input window, operand 1, single buffered']
    #allocation7 [shape = 's32[1]{0}', space=sflag, size = 0x4, scoped, tag = 'scoped memory for tpu_custom_call.1']
    #allocation8 [shape = 'u8[512]{0}', space=vmem, size = 0x400, scoped, tag = 'input window, operand 3, single buffered']
    #allocation9 [shape = 'u8[512]{0}', space=vmem, size = 0x400, scoped, tag = 'input window, operand 4, single buffered']
    #allocation10 [shape = 's32[1]{0}', space=sflag, size = 0x4, scoped, tag = 'scoped memory for tpu_custom_call.1']
    #allocation11 [shape = 'u8[131072]{0}', space=vmem, size = 0x20000, scoped, tag = 'input window, operand 5, single buffered']
    #allocation12 [shape = 'u8[32768]{0}', space=vmem, size = 0x8000, scoped, tag = 'output window, operand 0']
    %12 = vsyncpa [#allocation4], 0
    %s13 = scalar_lea.sflag [#allocation4], 1
    %14 = vsyncpa %s13, 0
    %15 = vsyncpa [#allocation7], 0
    %16 = vsyncpa [#allocation10], 0
    %17 = vsyncpa [#allocation5], 0
    %s18 = scalar_lea.sflag [#allocation5], 1
    %19 = vsyncpa %s18, 0
    loop: start=0, step=1, limit=4
    $region2: #{tpu_custom_call.1} parent=1 // loop_pre_header
      _
    $region3: #{tpu_custom_call.1} parent=1 // loop_header
      %s21 = sphi 0, %s25
      %p22 = scmp.ge.s32.totalorder %s21, 4
      %s28 = sphi 0, %s40
      %s29 = sphi 0, %s36
      %s30 = sphi 0, %s28
      %s31 = sphi 0, %s29
      %s32 = sphi 0, %s30
      %s33 = sphi 0, %s31
      %s43 = sphi 0, %s45
      %s46 = sphi 0, %s43
      %s47 = sphi 0, %s46
      %s63 = sphi 0, %s47
      %s67 = sphi 0, %s67
      %s69 = sphi 0, %s67
      %s70 = sphi 0, %s69
      %s84 = sphi 0, %s70
      %s88 = sphi 0, %s88
      %s90 = sphi 0, %s88
      %s91 = sphi 0, %s90
      %s105 = sphi 0, %s91
      %s109 = sphi 0, %s109
      %s111 = sphi 0, %s109
      %s112 = sphi 0, %s111
      %s126 = sphi 0, %s112
      %s130 = sphi 0, %s130
      %s132 = sphi 0, %s130
      %s133 = sphi 0, %s132
      %s147 = sphi 0, %s133
      %s153 = sphi 0, %s155
      %s156 = sphi 0, %s153
      %s157 = sphi 0, %s156
      %s173 = sphi 0, %s157
      %s179 = sphi 0, %s181
      %s182 = sphi 0, %s179
      %s183 = sphi 0, %s182
      %s199 = sphi 0, %s183
      %s207 = sphi 0, %s209
      %s210 = sphi 0, %s207
      %s211 = sphi 0, %s210
      %s227 = sphi 0, %s211
    $region4: #{tpu_custom_call.1} parent=1 // loop_header_branch
      %24 = sbr.rel (%p22) target = $region8
    $region5: #{tpu_custom_call.1} parent=1 // loop_body
      %s26 = ssub.s32 %s21, 1
      %s27 = ssub.s32 %s21, 2
      %s34 = sadd.s32 1, %s29
      %p35 = scmp.ge.s32.totalorder %s34, 1
      %s36 = scalar_select %p35, 0, %s34
      %s37 = sadd.s32 1, %s28
      %s38 = scalar_select %p35, %s37, %s28
      %p39 = scmp.ge.s32.totalorder %s38, 2
      %s40 = scalar_select %p39, 0, %s38
      %s41 = ssub.s32 %s28, %s40
      %p42 = scmp.eq.s32.totalorder %s41, 0
      %s44 = sadd.s32 %s43, 1
      %s45 = scalar_select %p42, %s43, %s44
      %p48 = pneg %p42
      %p49 = scmp.eq.s32.totalorder %s21, 1
      %p50 = por %p48, %p49
      %p51 = scmp.ne.s32.totalorder %s43, %s46
      %p52 = scmp.eq.s32.totalorder %s21, 0
      %p53 = por %p51, %p52
      %p54 = scmp.ne.s32.totalorder %s43, %s46
      %p55 = scmp.eq.s32.totalorder %s26, 1
      %p56 = por %p54, %p55
      %p57 = scmp.ne.s32.totalorder %s46, %s47
      %p58 = scmp.eq.s32.totalorder %s26, 0
      %p59 = por %p57, %p58
      %p60 = scmp.ne.s32.totalorder %s46, %s47
      %p61 = scmp.eq.s32.totalorder %s27, 1
      %p62 = por %p60, %p61
      %p64 = scmp.ne.s32.totalorder %s47, %s63
      %p65 = scmp.eq.s32.totalorder %s27, 0
      %p66 = por %p64, %p65
      %s68 = sadd.s32 %s67, 1
      %p71 = scmp.eq.s32.totalorder %s21, 1
      %p72 = scmp.ne.s32.totalorder %s67, %s69
      %p73 = scmp.eq.s32.totalorder %s21, 0
      %p74 = por %p72, %p73
      %p75 = scmp.ne.s32.totalorder %s67, %s69
      %p76 = scmp.eq.s32.totalorder %s26, 1
      %p77 = por %p75, %p76
      %p78 = scmp.ne.s32.totalorder %s69, %s70
      %p79 = scmp.eq.s32.totalorder %s26, 0
      %p80 = por %p78, %p79
      %p81 = scmp.ne.s32.totalorder %s69, %s70
      %p82 = scmp.eq.s32.totalorder %s27, 1
      %p83 = por %p81, %p82
      %p85 = scmp.ne.s32.totalorder %s70, %s84
      %p86 = scmp.eq.s32.totalorder %s27, 0
      %p87 = por %p85, %p86
      %s89 = sadd.s32 %s88, 1
      %p92 = scmp.eq.s32.totalorder %s21, 1
      %p93 = scmp.ne.s32.totalorder %s88, %s90
      %p94 = scmp.eq.s32.totalorder %s21, 0
      %p95 = por %p93, %p94
      %p96 = scmp.ne.s32.totalorder %s88, %s90
      %p97 = scmp.eq.s32.totalorder %s26, 1
      %p98 = por %p96, %p97
      %p99 = scmp.ne.s32.totalorder %s90, %s91
      %p100 = scmp.eq.s32.totalorder %s26, 0
      %p101 = por %p99, %p100
      %p102 = scmp.ne.s32.totalorder %s90, %s91
      %p103 = scmp.eq.s32.totalorder %s27, 1
      %p104 = por %p102, %p103
      %p106 = scmp.ne.s32.totalorder %s91, %s105
      %p107 = scmp.eq.s32.totalorder %s27, 0
      %p108 = por %p106, %p107
      %s110 = sadd.s32 %s109, 1
      %p113 = scmp.eq.s32.totalorder %s21, 1
      %p114 = scmp.ne.s32.totalorder %s109, %s111
      %p115 = scmp.eq.s32.totalorder %s21, 0
      %p116 = por %p114, %p115
      %p117 = scmp.ne.s32.totalorder %s109, %s111
      %p118 = scmp.eq.s32.totalorder %s26, 1
      %p119 = por %p117, %p118
      %p120 = scmp.ne.s32.totalorder %s111, %s112
      %p121 = scmp.eq.s32.totalorder %s26, 0
      %p122 = por %p120, %p121
      %p123 = scmp.ne.s32.totalorder %s111, %s112
      %p124 = scmp.eq.s32.totalorder %s27, 1
      %p125 = por %p123, %p124
      %p127 = scmp.ne.s32.totalorder %s112, %s126
      %p128 = scmp.eq.s32.totalorder %s27, 0
      %p129 = por %p127, %p128
      %s131 = sadd.s32 %s130, 1
      %p134 = scmp.eq.s32.totalorder %s21, 1
      %p135 = scmp.ne.s32.totalorder %s130, %s132
      %p136 = scmp.eq.s32.totalorder %s21, 0
      %p137 = por %p135, %p136
      %p138 = scmp.ne.s32.totalorder %s130, %s132
      %p139 = scmp.eq.s32.totalorder %s26, 1
      %p140 = por %p138, %p139
      %p141 = scmp.ne.s32.totalorder %s132, %s133
      %p142 = scmp.eq.s32.totalorder %s26, 0
      %p143 = por %p141, %p142
      %p144 = scmp.ne.s32.totalorder %s132, %s133
      %p145 = scmp.eq.s32.totalorder %s27, 1
      %p146 = por %p144, %p145
      %p148 = scmp.ne.s32.totalorder %s133, %s147
      %p149 = scmp.eq.s32.totalorder %s27, 0
      %p150 = por %p148, %p149
      %s151 = ssub.s32 %s29, %s36
      %p152 = scmp.eq.s32.totalorder %s151, 0
      %s154 = sadd.s32 %s153, 1
      %s155 = scalar_select %p152, %s153, %s154
      %p158 = pneg %p152
      %p159 = scmp.eq.s32.totalorder %s21, 1
      %p160 = por %p158, %p159
      %p161 = scmp.ne.s32.totalorder %s153, %s156
      %p162 = scmp.eq.s32.totalorder %s21, 0
      %p163 = por %p161, %p162
      %p164 = scmp.ne.s32.totalorder %s153, %s156
      %p165 = scmp.eq.s32.totalorder %s26, 1
      %p166 = por %p164, %p165
      %p167 = scmp.ne.s32.totalorder %s156, %s157
      %p168 = scmp.eq.s32.totalorder %s26, 0
      %p169 = por %p167, %p168
      %p170 = scmp.ne.s32.totalorder %s156, %s157
      %p171 = scmp.eq.s32.totalorder %s27, 1
      %p172 = por %p170, %p171
      %p174 = scmp.ne.s32.totalorder %s157, %s173
      %p175 = scmp.eq.s32.totalorder %s27, 0
      %p176 = por %p174, %p175
      %s177 = ssub.s32 %s29, %s36
      %p178 = scmp.eq.s32.totalorder %s177, 0
      %s180 = sadd.s32 %s179, 1
      %s181 = scalar_select %p178, %s179, %s180
      %p184 = pneg %p178
      %p185 = scmp.eq.s32.totalorder %s21, 1
      %p186 = por %p184, %p185
      %p187 = scmp.ne.s32.totalorder %s179, %s182
      %p188 = scmp.eq.s32.totalorder %s21, 0
      %p189 = por %p187, %p188
      %p190 = scmp.ne.s32.totalorder %s179, %s182
      %p191 = scmp.eq.s32.totalorder %s26, 1
      %p192 = por %p190, %p191
      %p193 = scmp.ne.s32.totalorder %s182, %s183
      %p194 = scmp.eq.s32.totalorder %s26, 0
      %p195 = por %p193, %p194
      %p196 = scmp.ne.s32.totalorder %s182, %s183
      %p197 = scmp.eq.s32.totalorder %s27, 1
      %p198 = por %p196, %p197
      %p200 = scmp.ne.s32.totalorder %s183, %s199
      %p201 = scmp.eq.s32.totalorder %s27, 0
      %p202 = por %p200, %p201
      %s203 = ssub.s32 %s28, %s40
      %s204 = ssub.s32 %s29, %s36
      %s205 = sor.u32 %s203, %s204
      %p206 = scmp.eq.s32.totalorder %s205, 0
      %s208 = sadd.s32 %s207, 1
      %s209 = scalar_select %p206, %s207, %s208
      %p212 = pneg %p206
      %p213 = scmp.eq.s32.totalorder %s21, 1
      %p214 = por %p212, %p213
      %p215 = scmp.ne.s32.totalorder %s207, %s210
      %p216 = scmp.eq.s32.totalorder %s21, 0
      %p217 = por %p215, %p216
      %p218 = scmp.ne.s32.totalorder %s207, %s210
      %p219 = scmp.eq.s32.totalorder %s26, 1
      %p220 = por %p218, %p219
      %p221 = scmp.ne.s32.totalorder %s210, %s211
      %p222 = scmp.eq.s32.totalorder %s26, 0
      %p223 = por %p221, %p222
      %p224 = scmp.ne.s32.totalorder %s210, %s211
      %p225 = scmp.eq.s32.totalorder %s27, 1
      %p226 = por %p224, %p225
      %p228 = scmp.ne.s32.totalorder %s211, %s227
      %p229 = scmp.eq.s32.totalorder %s27, 0
      %p230 = por %p228, %p229
      %p231 = scmp.le.s32.totalorder 1, %s21
      %p232 = scmp.lt.s32.totalorder %s21, 3
      %p233 = pnand %p231, %p232
      %p234 = pneg %p233
      // Predicated region
      $region9: #{tpu_custom_call.1} parent=5 // pred_check
        _
      $region10: #{tpu_custom_call.1} parent=5 // pred_check_branch
        %236 = sbr.rel (%p233) target = $region12
      $region11: #{tpu_custom_call.1} parent=5 // pred_region
        %s237 = ssub.s32 %s21, 1
        // Predicated region
        $region13: #{tpu_custom_call.1} parent=11 // pred_check
          %p238 = pneg %p80
        $region14: #{tpu_custom_call.1} parent=11 // pred_check_branch
          %240 = sbr.rel (%p238) target = $region16
        $region15: #{tpu_custom_call.1} parent=11 // pred_region
          %242 = vsyncadd [#allocation7], 0
          %s243 = sshll.u32 %s1, 4
          %s244 = int_to_ptr.hbm [resolvable:$true] %s243
          %s245 = sshll.u32 [#allocation6], 4
          %s246 = int_to_ptr.vmem [resolvable:$true] %s245
          %251 = dma.hbm_to_vmem [thread:$0]  %s244, 1024, %s246, [#allocation7], 64, 64, 4
        $region16: #{tpu_custom_call.1} parent=11 // pred_fallthru
          _
        // Predicated region
        $region17: #{tpu_custom_call.1} parent=11 // pred_check
          %p252 = pneg %p101
        $region18: #{tpu_custom_call.1} parent=11 // pred_check_branch
          %254 = sbr.rel (%p252) target = $region20
        $region19: #{tpu_custom_call.1} parent=11 // pred_region
          _
        $region20: #{tpu_custom_call.1} parent=11 // pred_fallthru
          _
        // Predicated region
        $region21: #{tpu_custom_call.1} parent=11 // pred_check
          %p255 = pneg %p122
        $region22: #{tpu_custom_call.1} parent=11 // pred_check_branch
          %257 = sbr.rel (%p255) target = $region24
        $region23: #{tpu_custom_call.1} parent=11 // pred_region
          %259 = vsyncadd [#allocation7], 0
          %s261 = sshll.u32 %s3, 4
          %s262 = int_to_ptr.hbm [resolvable:$true] %s261
          %s263 = sshll.u32 [#allocation8], 4
          %s264 = int_to_ptr.vmem [resolvable:$true] %s263
          %266 = dma.hbm_to_vmem [thread:$0]  %s262, 16, %s264, [#allocation7]
        $region24: #{tpu_custom_call.1} parent=11 // pred_fallthru
          _
        // Predicated region
        $region25: #{tpu_custom_call.1} parent=11 // pred_check
          %p267 = pneg %p143
        $region26: #{tpu_custom_call.1} parent=11 // pred_check_branch
          %269 = sbr.rel (%p267) target = $region28
        $region27: #{tpu_custom_call.1} parent=11 // pred_region
          %271 = vsyncadd [#allocation10], 0
          %s273 = sshll.u32 %s4, 4
          %s274 = int_to_ptr.hbm [resolvable:$true] %s273
          %s275 = sshll.u32 [#allocation9], 4
          %s276 = int_to_ptr.vmem [resolvable:$true] %s275
          %278 = dma.hbm_to_vmem [thread:$0]  %s274, 16, %s276, [#allocation10]
        $region28: #{tpu_custom_call.1} parent=11 // pred_fallthru
          _
        // Predicated region
        $region29: #{tpu_custom_call.1} parent=11 // pred_check
          %p279 = pneg %p169
        $region30: #{tpu_custom_call.1} parent=11 // pred_check_branch
          %281 = sbr.rel (%p279) target = $region32
        $region31: #{tpu_custom_call.1} parent=11 // pred_region
          %s282 = smul.u32 4, %s31
          %284 = vsyncadd [#allocation10], 0
          %s285 = smul.addr %s282, 4
          %s286 = scalar_lea.hbm %s5, %s285
          %s287 = sshll.u32 %s286, 4
          %s288 = int_to_ptr.hbm [resolvable:$true] %s287
          %s289 = sshll.u32 [#allocation11], 4
          %s290 = int_to_ptr.vmem [resolvable:$true] %s289
          %295 = dma.hbm_to_vmem [thread:$0]  %s288, 4096, %s290, [#allocation10], 256, 256, 16
        $region32: #{tpu_custom_call.1} parent=11 // pred_fallthru
          _
        // Predicated region
        $region33: #{tpu_custom_call.1} parent=11 // pred_check
          %p296 = pneg %p195
        $region34: #{tpu_custom_call.1} parent=11 // pred_check_branch
          %298 = sbr.rel (%p296) target = $region36
        $region35: #{tpu_custom_call.1} parent=11 // pred_region
          %s299 = smul.u32 4, %s31
          %p300 = scmp.lt.s32.totalorder %s299, 3
          %s301 = scalar_select %p300, %s299, 3
          %s302 = scalar_lea.vmem %s6, %s301
          %s303 = smul.u32 4, %s31
        $region36: #{tpu_custom_call.1} parent=11 // pred_fallthru
          _
      $region12: #{tpu_custom_call.1} parent=5 // pred_fallthru
        _
      %p304 = scmp.lt.s32.totalorder %s21, 2
      // Predicated region
      $region37: #{tpu_custom_call.1} parent=5 // pred_check
        %p305 = pneg %p304
      $region38: #{tpu_custom_call.1} parent=5 // pred_check_branch
        %307 = sbr.rel (%p305) target = $region40
      $region39: #{tpu_custom_call.1} parent=5 // pred_region
        // Predicated region
        $region41: #{tpu_custom_call.1} parent=39 // pred_check
          %p308 = pneg %p53
        $region42: #{tpu_custom_call.1} parent=39 // pred_check_branch
          %310 = sbr.rel (%p308) target = $region44
        $region43: #{tpu_custom_call.1} parent=39 // pred_region
          %s311 = sand.u32 %s43, 1
          %s312 = scalar_lea.sflag [#allocation4], %s311
          %s313 = sand.u32 %s43, 1
          %s314 = smul.addr %s313, 4
          %s315 = scalar_lea.vmem [#allocation3], %s314
          %317 = vsyncadd %s312, 0
          %s318 = smul.addr %s28, 4
          %s319 = scalar_lea.hbm %s0, %s318
          %s321 = sshll.u32 %s319, 4
          %s322 = int_to_ptr.hbm [resolvable:$true] %s321
          %s323 = sshll.u32 %s315, 4
          %s324 = int_to_ptr.vmem [resolvable:$true] %s323
          %326 = dma.hbm_to_vmem [thread:$0]  %s322, 64, %s324, %s312
        $region44: #{tpu_custom_call.1} parent=39 // pred_fallthru
          _
      $region40: #{tpu_custom_call.1} parent=5 // pred_fallthru
        _
      %p327 = scmp.le.s32.totalorder 1, %s21
      %p328 = scmp.lt.s32.totalorder %s21, 3
      %p329 = pnand %p327, %p328
      %p330 = pneg %p329
      // Predicated region
      $region45: #{tpu_custom_call.1} parent=5 // pred_check
        _
      $region46: #{tpu_custom_call.1} parent=5 // pred_check_branch
        %332 = sbr.rel (%p329) target = $region48
      $region47: #{tpu_custom_call.1} parent=5 // pred_region
        %s333 = ssub.s32 %s21, 1
        %s334 = sand.u32 %s46, 1
        %s335 = scalar_lea.sflag [#allocation4], %s334
        %s336 = sand.u32 %s46, 1
        %s337 = smul.addr %s336, 4
        %s338 = scalar_lea.vmem [#allocation3], %s337
        // Predicated region
        $region49: #{tpu_custom_call.1} parent=47 // pred_check
          %p339 = pneg %p59
        $region50: #{tpu_custom_call.1} parent=47 // pred_check_branch
          %341 = sbr.rel (%p339) target = $region52
        $region51: #{tpu_custom_call.1} parent=47 // pred_region
          %343 = dma.done %s335, 64
        $region52: #{tpu_custom_call.1} parent=47 // pred_fallthru
          _
        // Predicated region
        $region53: #{tpu_custom_call.1} parent=47 // pred_check
          %p344 = pneg %p80
        $region54: #{tpu_custom_call.1} parent=47 // pred_check_branch
          %346 = sbr.rel (%p344) target = $region56
        $region55: #{tpu_custom_call.1} parent=47 // pred_region
          %348 = dma.done [#allocation7], 1024
        $region56: #{tpu_custom_call.1} parent=47 // pred_fallthru
          _
        // Predicated region
        $region57: #{tpu_custom_call.1} parent=47 // pred_check
          %p349 = pneg %p122
        $region58: #{tpu_custom_call.1} parent=47 // pred_check_branch
          %351 = sbr.rel (%p349) target = $region60
        $region59: #{tpu_custom_call.1} parent=47 // pred_region
          %353 = dma.done [#allocation7], 16
        $region60: #{tpu_custom_call.1} parent=47 // pred_fallthru
          _
        // Predicated region
        $region61: #{tpu_custom_call.1} parent=47 // pred_check
          %p354 = pneg %p143
        $region62: #{tpu_custom_call.1} parent=47 // pred_check_branch
          %356 = sbr.rel (%p354) target = $region64
        $region63: #{tpu_custom_call.1} parent=47 // pred_region
          %358 = dma.done [#allocation10], 16
        $region64: #{tpu_custom_call.1} parent=47 // pred_fallthru
          _
        // Predicated region
        $region65: #{tpu_custom_call.1} parent=47 // pred_check
          %p359 = pneg %p169
        $region66: #{tpu_custom_call.1} parent=47 // pred_check_branch
          %361 = sbr.rel (%p359) target = $region68
        $region67: #{tpu_custom_call.1} parent=47 // pred_region
          %363 = dma.done [#allocation10], 4096
        $region68: #{tpu_custom_call.1} parent=47 // pred_fallthru
          _
        %s364 = sand.u32 %s46, 1
        %s365 = scalar_lea.sflag [#allocation4], %s364
        %s366 = sand.u32 %s46, 1
        %s367 = smul.addr %s366, 4
        %s368 = scalar_lea.vmem [#allocation3], %s367
        %p369 = pneg %p59
        %p370 = pneg %p56
        %p371 = pneg %p80
        %p372 = pneg %p77
        %p373 = pneg %p101
        %p374 = pneg %p98
        %p375 = pneg %p122
        %p376 = pneg %p119
        %p377 = pneg %p143
        %p378 = pneg %p140
        %p379 = pneg %p169
        %p380 = pneg %p166
        %s381 = smul.u32 4, %s31
        %p382 = scmp.lt.s32.totalorder %s381, 3
        %s383 = scalar_select %p382, %s381, 3
        %s384 = scalar_lea.vmem %s6, %s383
        %p385 = pneg %p195
        %p386 = pneg %p192
        %p387 = pneg %p223
        %p388 = pneg %p220
        %s389 = sand.u32 %s210, 1
        %s390 = scalar_lea.sflag [#allocation5], %s389
        %s391 = sand.u32 %s210, 1
        %s392 = smul.addr %s391, 32
        %s393 = scalar_lea.vmem [#allocation12], %s392
        %s394 = smul.u32 4, %s31
        %s395 = smul.u32 4, %s31
        %p396 = scmp.lt.s32.totalorder %s395, 3
        %s397 = scalar_select %p396, %s395, 3
        %s398 = scalar_lea.vmem %s6, %s397
        %s399 = smul.u32 4, %s31
        %s400 = smul.u32 4, %s31
        %p401 = scmp.eq.s32.totalorder %s31, 0
        // Predicated region
        $region69: #{tpu_custom_call.1} parent=47 // pred_check
          %p402 = pneg %p401
        $region70: #{tpu_custom_call.1} parent=47 // pred_check_branch
          %404 = sbr.rel (%p402) target = $region72
        $region71: #{tpu_custom_call.1} parent=47 // pred_region
          %v405 = vld [vmem:[%s338] sm:$0xf]
          %v406 = vld [vmem:[#allocation6] sm:$0xf]
          %v407 = vld [vmem:[#allocation6 + $0x4] sm:$0xf]
          %v408 = vld [vmem:[#allocation6 + $0x8] sm:$0xf]
          %v409 = vld [vmem:[#allocation6 + $0xc] sm:$0xf]
          %v410 = vld [vmem:[#allocation6 + $0x10] sm:$0xf]
          %v411 = vld [vmem:[#allocation6 + $0x14] sm:$0xf]
          %v412 = vld [vmem:[#allocation6 + $0x18] sm:$0xf]
          %v413 = vld [vmem:[#allocation6 + $0x1c] sm:$0xf]
          %v414 = vld [vmem:[#allocation6 + $0x20] sm:$0xf]
          %v415 = vld [vmem:[#allocation6 + $0x24] sm:$0xf]
          %v416 = vld [vmem:[#allocation6 + $0x28] sm:$0xf]
          %v417 = vld [vmem:[#allocation6 + $0x2c] sm:$0xf]
          %v418 = vld [vmem:[#allocation6 + $0x30] sm:$0xf]
          %v419 = vld [vmem:[#allocation6 + $0x34] sm:$0xf]
          %v420 = vld [vmem:[#allocation6 + $0x38] sm:$0xf]
          %v421 = vld [vmem:[#allocation6 + $0x3c] sm:$0xf]
          %v422 = vld [vmem:[%s2] sm:$0x1]
          %v424 = vperm.slane %v422, 0
          %v442 = vunpack.c.l.b16 %v406
          %v443 = vunpack.c.l.b16 %v407
          %v444 = vunpack.c.l.b16 %v408
          %v445 = vunpack.c.l.b16 %v409
          %v446 = vunpack.c.l.b16 %v410
          %v447 = vunpack.c.l.b16 %v411
          %v448 = vunpack.c.l.b16 %v412
          %v449 = vunpack.c.l.b16 %v413
          %v450 = vunpack.c.l.b16 %v414
          %v451 = vunpack.c.l.b16 %v415
          %v452 = vunpack.c.l.b16 %v416
          %v453 = vunpack.c.l.b16 %v417
          %v454 = vunpack.c.l.b16 %v418
          %v455 = vunpack.c.l.b16 %v419
          %v456 = vunpack.c.l.b16 %v420
          %v457 = vunpack.c.l.b16 %v421
          %v458 = vpack.c.b16 %v443, %v442
          %v459 = vpack.c.b16 %v445, %v444
          %v460 = vpack.c.b16 %v447, %v446
          %v461 = vpack.c.b16 %v449, %v448
          %v462 = vpack.c.b16 %v451, %v450
          %v463 = vpack.c.b16 %v453, %v452
          %v464 = vpack.c.b16 %v455, %v454
          %v465 = vpack.c.b16 %v457, %v456
          %474 = vmatpush.bf16.msra.mxu0 %v465
          %475 = vmatpush.bf16.msra.mxu0 %v464
          %476 = vmatpush.bf16.msra.mxu0 %v463
          %477 = vmatpush.bf16.msra.mxu0 %v462
          %478 = vmatpush.bf16.msra.mxu0 %v461
          %479 = vmatpush.bf16.msra.mxu0 %v460
          %480 = vmatpush.bf16.msra.mxu0 %v459
          %481 = vmatpush.bf16.msra.mxu0 %v458
          %482 = vmatmul.bf16.gmra.mxu0 %v405
          %v483 = vpop.f32.mrf.mxu0
          %v484 = vadd.f32 %v424, %v483
          %v485 = vpop.f32.mrf.mxu0
          %486 = vdwg.mxu0
          %v487 = vmul.f32 %v484, 0.5
          %v488 = vmul.f32 %v484, 0.70710677
          %v489 = vmul.f32 %v488, %v488
          %v490 = vmin.f32 16.0, %v489
          %v491 = vmul.f32 %v490, 2.1237322e-06
          %v492 = vadd.f32 %v491, 0.00028619796
          %v493 = vmul.f32 %v490, %v492
          %v494 = vadd.f32 %v493, 0.0036580483
          %v495 = vmul.f32 %v490, %v494
          %v496 = vadd.f32 %v495, 0.05243302
          %v497 = vmul.f32 %v490, %v496
          %v498 = vadd.f32 %v497, 0.18741608
          %v499 = vmul.f32 %v490, %v498
          %v500 = vadd.f32 %v499, 1.1283791
          %v501 = vmul.f32 %v488, %v500
          %v502 = vmul.f32 %v490, 3.8918573e-05
          %v503 = vadd.f32 %v502, 0.001143296
          %v504 = vmul.f32 %v490, %v503
          %v505 = vadd.f32 %v504, 0.014752088
          %v506 = vmul.f32 %v490, %v505
          %v507 = vadd.f32 %v506, 0.112945676
          %v508 = vmul.f32 %v490, %v507
          %v509 = vadd.f32 %v508, 0.4994258
          %v510 = vmul.f32 %v490, %v509
          %v511 = vadd.f32 %v510, 1.0
          %v512 = vrcp.pop %v511
          %v513 = vmul.f32 %v511, %v512
          %v514 = vsub.f32 1.0, %v513
          %v515 = vmul.f32 %v512, %v514
          %v516 = vadd.f32 %v512, %v515
          %vm517 = vweird.f32 %v511
          %vm518 = vweird.f32 %v512
          %vm519 = vmor %vm517, %vm518
          %v520 = vsel %vm519, %v512, %v516
          %v521 = vand.u32 2147483647, %v511
          %vm522 = vcmp.eq.f32.partialorder %v521, 8.507059e+37
          %v523 = vand.u32 %v511, 2147483648
          %v524 = vor.u32 1.1754944e-38, %v523
          %v525 = vsel %vm522, %v524, %v520
          %v526 = vmul.f32 %v501, %v525
          %v527 = vmin.f32 %v526, 1.0
          %v528 = vmax.f32 %v527, -1.0
          %v529 = vadd.f32 %v528, 1.0
          %v530 = vmul.f32 %v487, %v529
          %531 = vadd.xlane.f32.xlu0 %v530
          %v532 = vpop.xlane.xlu0 %531
          %v533 = vrcp.pop 128.0
          %v534 = vmul.f32 128.0, %v533
          %v535 = vsub.f32 1.0, %v534
          %v536 = vmul.f32 %v533, %v535
          %v537 = vadd.f32 %v533, %v536
          %vm538 = vweird.f32 %v533
          %v539 = vsel %vm538, %v533, %v537
          %v540 = vmul.f32 %v532, %v539
          %v541 = vsub.f32 %v530, %v540
          %v542 = vmul.f32 %v541, %v541
          %543 = vadd.xlane.f32.xlu0 %v542
          %v544 = vpop.xlane.xlu0 %543
          %v545 = vmul.f32 %v544, %v539
          %v546 = vadd.f32 %v545, 1e-12
          %v547 = vrsqrt.pop %v546
          %v548 = vmul.f32 %v547, %v546
          %v549 = vmul.f32 %v548, %v547
          %v550 = vmul.f32 0.5, %v549
          %v551 = vsub.f32 1.5, %v550
          %v552 = vmul.f32 %v547, %v551
          %vm553 = vweird.f32 %v546
          %vm554 = vweird.f32 %v547
          %vm555 = vmor %vm553, %vm554
          %v556 = vsel %vm555, %v547, %v552
          %v557 = vmul.f32 %v541, %v556
          %v558 = vld [vmem:[#allocation8] sm:$0x1]
          %v560 = vperm.slane %v558, 0
          %v562 = vmul.f32 %v557, %v560
          %v563 = vld [vmem:[#allocation9] sm:$0x1]
          %v565 = vperm.slane %v563, 0
          %v567 = vadd.f32 %v562, %v565
          %v568 = vpack.c.bf16 %v567, %v567
          %569 = vst [vmem:[#allocation2] sm:$0xf] %v568
        $region72: #{tpu_custom_call.1} parent=47 // pred_fallthru
          _
        %v570 = vld [vmem:[#allocation2] sm:$0xf]
        %v571 = vld [vmem:[#allocation11] sm:$0xff]
        %v572 = vld [vmem:[#allocation11 + $0x8] sm:$0xff]
        %v573 = vld [vmem:[#allocation11 + $0x10] sm:$0xff]
        %v574 = vld [vmem:[#allocation11 + $0x18] sm:$0xff]
        %v575 = vld [vmem:[#allocation11 + $0x20] sm:$0xff]
        %v576 = vld [vmem:[#allocation11 + $0x28] sm:$0xff]
        %v577 = vld [vmem:[#allocation11 + $0x30] sm:$0xff]
        %v578 = vld [vmem:[#allocation11 + $0x38] sm:$0xff]
        %v579 = vld [vmem:[#allocation11 + $0x40] sm:$0xff]
        %v580 = vld [vmem:[#allocation11 + $0x48] sm:$0xff]
        %v581 = vld [vmem:[#allocation11 + $0x50] sm:$0xff]
        %v582 = vld [vmem:[#allocation11 + $0x58] sm:$0xff]
        %v583 = vld [vmem:[#allocation11 + $0x60] sm:$0xff]
        %v584 = vld [vmem:[#allocation11 + $0x68] sm:$0xff]
        %v585 = vld [vmem:[#allocation11 + $0x70] sm:$0xff]
        %v586 = vld [vmem:[#allocation11 + $0x78] sm:$0xff]
        %v587 = vld [vmem:[#allocation11 + $0x80] sm:$0xff]
        %v588 = vld [vmem:[#allocation11 + $0x88] sm:$0xff]
        %v589 = vld [vmem:[#allocation11 + $0x90] sm:$0xff]
        %v590 = vld [vmem:[#allocation11 + $0x98] sm:$0xff]
        %v591 = vld [vmem:[#allocation11 + $0xa0] sm:$0xff]
        %v592 = vld [vmem:[#allocation11 + $0xa8] sm:$0xff]
        %v593 = vld [vmem:[#allocation11 + $0xb0] sm:$0xff]
        %v594 = vld [vmem:[#allocation11 + $0xb8] sm:$0xff]
        %v595 = vld [vmem:[#allocation11 + $0xc0] sm:$0xff]
        %v596 = vld [vmem:[#allocation11 + $0xc8] sm:$0xff]
        %v597 = vld [vmem:[#allocation11 + $0xd0] sm:$0xff]
        %v598 = vld [vmem:[#allocation11 + $0xd8] sm:$0xff]
        %v599 = vld [vmem:[#allocation11 + $0xe0] sm:$0xff]
        %v600 = vld [vmem:[#allocation11 + $0xe8] sm:$0xff]
        %v601 = vld [vmem:[#allocation11 + $0xf0] sm:$0xff]
        %v602 = vld [vmem:[#allocation11 + $0xf8] sm:$0xff]
        %v603 = vld [vmem:[%s398] sm:$0xf]
        %v605 = vperm.slane %v603, 0
        %v606 = vperm.slane %v603, 1
        %v607 = vperm.slane %v603, 2
        %v608 = vperm.slane %v603, 3
        %v645 = vunpack.c.l.b16 %v571
        %v646 = vunpack.c.h.b16 %v571
        %v647 = vunpack.c.l.b16 %v572
        %v648 = vunpack.c.h.b16 %v572
        %v649 = vunpack.c.l.b16 %v573
        %v650 = vunpack.c.h.b16 %v573
        %v651 = vunpack.c.l.b16 %v574
        %v652 = vunpack.c.h.b16 %v574
        %v653 = vunpack.c.l.b16 %v575
        %v654 = vunpack.c.h.b16 %v575
        %v655 = vunpack.c.l.b16 %v576
        %v656 = vunpack.c.h.b16 %v576
        %v657 = vunpack.c.l.b16 %v577
        %v658 = vunpack.c.h.b16 %v577
        %v659 = vunpack.c.l.b16 %v578
        %v660 = vunpack.c.h.b16 %v578
        %v661 = vunpack.c.l.b16 %v579
        %v662 = vunpack.c.h.b16 %v579
        %v663 = vunpack.c.l.b16 %v580
        %v664 = vunpack.c.h.b16 %v580
        %v665 = vunpack.c.l.b16 %v581
        %v666 = vunpack.c.h.b16 %v581
        %v667 = vunpack.c.l.b16 %v582
        %v668 = vunpack.c.h.b16 %v582
        %v669 = vunpack.c.l.b16 %v583
        %v670 = vunpack.c.h.b16 %v583
        %v671 = vunpack.c.l.b16 %v584
        %v672 = vunpack.c.h.b16 %v584
        %v673 = vunpack.c.l.b16 %v585
        %v674 = vunpack.c.h.b16 %v585
        %v675 = vunpack.c.l.b16 %v586
        %v676 = vunpack.c.h.b16 %v586
        %v677 = vunpack.c.l.b16 %v587
        %v678 = vunpack.c.h.b16 %v587
        %v679 = vunpack.c.l.b16 %v588
        %v680 = vunpack.c.h.b16 %v588
        %v681 = vunpack.c.l.b16 %v589
        %v682 = vunpack.c.h.b16 %v589
        %v683 = vunpack.c.l.b16 %v590
        %v684 = vunpack.c.h.b16 %v590
        %v685 = vunpack.c.l.b16 %v591
        %v686 = vunpack.c.h.b16 %v591
        %v687 = vunpack.c.l.b16 %v592
        %v688 = vunpack.c.h.b16 %v592
        %v689 = vunpack.c.l.b16 %v593
        %v690 = vunpack.c.h.b16 %v593
        %v691 = vunpack.c.l.b16 %v594
        %v692 = vunpack.c.h.b16 %v594
        %v693 = vunpack.c.l.b16 %v595
        %v694 = vunpack.c.h.b16 %v595
        %v695 = vunpack.c.l.b16 %v596
        %v696 = vunpack.c.h.b16 %v596
        %v697 = vunpack.c.l.b16 %v597
        %v698 = vunpack.c.h.b16 %v597
        %v699 = vunpack.c.l.b16 %v598
        %v700 = vunpack.c.h.b16 %v598
        %v701 = vunpack.c.l.b16 %v599
        %v702 = vunpack.c.h.b16 %v599
        %v703 = vunpack.c.l.b16 %v600
        %v704 = vunpack.c.h.b16 %v600
        %v705 = vunpack.c.l.b16 %v601
        %v706 = vunpack.c.h.b16 %v601
        %v707 = vunpack.c.l.b16 %v602
        %v708 = vunpack.c.h.b16 %v602
        %v709 = vpack.c.b16 %v649, %v645
        %v710 = vpack.c.b16 %v650, %v646
        %v711 = vpack.c.b16 %v651, %v647
        %v712 = vpack.c.b16 %v652, %v648
        %v713 = vpack.c.b16 %v657, %v653
        %v714 = vpack.c.b16 %v658, %v654
        %v715 = vpack.c.b16 %v659, %v655
        %v716 = vpack.c.b16 %v660, %v656
        %v717 = vpack.c.b16 %v665, %v661
        %v718 = vpack.c.b16 %v666, %v662
        %v719 = vpack.c.b16 %v667, %v663
        %v720 = vpack.c.b16 %v668, %v664
        %v721 = vpack.c.b16 %v673, %v669
        %v722 = vpack.c.b16 %v674, %v670
        %v723 = vpack.c.b16 %v675, %v671
        %v724 = vpack.c.b16 %v676, %v672
        %v725 = vpack.c.b16 %v681, %v677
        %v726 = vpack.c.b16 %v682, %v678
        %v727 = vpack.c.b16 %v683, %v679
        %v728 = vpack.c.b16 %v684, %v680
        %v729 = vpack.c.b16 %v689, %v685
        %v730 = vpack.c.b16 %v690, %v686
        %v731 = vpack.c.b16 %v691, %v687
        %v732 = vpack.c.b16 %v692, %v688
        %v733 = vpack.c.b16 %v697, %v693
        %v734 = vpack.c.b16 %v698, %v694
        %v735 = vpack.c.b16 %v699, %v695
        %v736 = vpack.c.b16 %v700, %v696
        %v737 = vpack.c.b16 %v705, %v701
        %v738 = vpack.c.b16 %v706, %v702
        %v739 = vpack.c.b16 %v707, %v703
        %v740 = vpack.c.b16 %v708, %v704
        %773 = vmatpush.bf16.msra.mxu0 %v737
        %774 = vmatpush.bf16.msra.mxu0 %v733
        %775 = vmatpush.bf16.msra.mxu0 %v729
        %776 = vmatpush.bf16.msra.mxu0 %v725
        %777 = vmatpush.bf16.msra.mxu0 %v721
        %778 = vmatpush.bf16.msra.mxu0 %v717
        %779 = vmatpush.bf16.msra.mxu0 %v713
        %780 = vmatpush.bf16.msra.mxu0 %v709
        %781 = vmatmul.bf16.gmra.mxu0 %v570
        %v782 = vpop.f32.mrf.mxu0
        %v783 = vadd.f32 %v605, %v782
        %v784 = vpop.f32.mrf.mxu0
        %785 = vdwg.mxu0
        %786 = vmatpush.bf16.msra.mxu0 %v738
        %787 = vmatpush.bf16.msra.mxu0 %v734
        %788 = vmatpush.bf16.msra.mxu0 %v730
        %789 = vmatpush.bf16.msra.mxu0 %v726
        %790 = vmatpush.bf16.msra.mxu0 %v722
        %791 = vmatpush.bf16.msra.mxu0 %v718
        %792 = vmatpush.bf16.msra.mxu0 %v714
        %793 = vmatpush.bf16.msra.mxu0 %v710
        %794 = vmatmul.bf16.gmra.mxu0 %v570
        %v795 = vpop.f32.mrf.mxu0
        %v796 = vadd.f32 %v606, %v795
        %v797 = vpop.f32.mrf.mxu0
        %798 = vdwg.mxu0
        %799 = vmatpush.bf16.msra.mxu0 %v739
        %800 = vmatpush.bf16.msra.mxu0 %v735
        %801 = vmatpush.bf16.msra.mxu0 %v731
        %802 = vmatpush.bf16.msra.mxu0 %v727
        %803 = vmatpush.bf16.msra.mxu0 %v723
        %804 = vmatpush.bf16.msra.mxu0 %v719
        %805 = vmatpush.bf16.msra.mxu0 %v715
        %806 = vmatpush.bf16.msra.mxu0 %v711
        %807 = vmatmul.bf16.gmra.mxu0 %v570
        %v808 = vpop.f32.mrf.mxu0
        %v809 = vadd.f32 %v607, %v808
        %v810 = vpop.f32.mrf.mxu0
        %811 = vdwg.mxu0
        %812 = vmatpush.bf16.msra.mxu0 %v740
        %813 = vmatpush.bf16.msra.mxu0 %v736
        %814 = vmatpush.bf16.msra.mxu0 %v732
        %815 = vmatpush.bf16.msra.mxu0 %v728
        %816 = vmatpush.bf16.msra.mxu0 %v724
        %817 = vmatpush.bf16.msra.mxu0 %v720
        %818 = vmatpush.bf16.msra.mxu0 %v716
        %819 = vmatpush.bf16.msra.mxu0 %v712
        %820 = vmatmul.bf16.gmra.mxu0 %v570
        %v821 = vpop.f32.mrf.mxu0
        %v822 = vadd.f32 %v608, %v821
        %v823 = vpop.f32.mrf.mxu0
        %824 = vdwg.mxu0
        %825 = vst [vmem:[%s393] sm:$0xff] %v783
        %826 = vst [vmem:[%s393 + $0x8] sm:$0xff] %v796
        %827 = vst [vmem:[%s393 + $0x10] sm:$0xff] %v809
        %828 = vst [vmem:[%s393 + $0x18] sm:$0xff] %v822
        %s829 = sand.u32 %s210, 1
        %s830 = scalar_lea.sflag [#allocation5], %s829
        %s831 = sand.u32 %s210, 1
        %s832 = smul.addr %s831, 32
        %s833 = scalar_lea.vmem [#allocation12], %s832
        // Predicated region
        $region73: #{tpu_custom_call.1} parent=47 // pred_check
          %p834 = pneg %p220
        $region74: #{tpu_custom_call.1} parent=47 // pred_check_branch
          %836 = sbr.rel (%p834) target = $region76
        $region75: #{tpu_custom_call.1} parent=47 // pred_region
          %s837 = smul.u32 4, %s31
          %839 = vsyncadd %s830, 0
          %s840 = smul.addr %s30, 4
          %s841 = sadd.s32 %s837, %s840
          %s842 = smul.addr %s841, 8
          %s843 = scalar_lea.hbm %s7, %s842
          %s845 = sshll.u32 %s833, 4
          %s846 = int_to_ptr.vmem [resolvable:$true] %s845
          %s847 = sshll.u32 %s843, 4
          %s848 = int_to_ptr.hbm [resolvable:$true] %s847
          %850 = dma.vmem_to_hbm [thread:$0]  %s846, 512, %s848, %s830
        $region76: #{tpu_custom_call.1} parent=47 // pred_fallthru
          _
      $region48: #{tpu_custom_call.1} parent=5 // pred_fallthru
        _
      %p851 = scmp.le.s32.totalorder 2, %s21
      // Predicated region
      $region77: #{tpu_custom_call.1} parent=5 // pred_check
        %p852 = pneg %p851
      $region78: #{tpu_custom_call.1} parent=5 // pred_check_branch
        %854 = sbr.rel (%p852) target = $region80
      $region79: #{tpu_custom_call.1} parent=5 // pred_region
        %s855 = ssub.s32 %s21, 2
        // Predicated region
        $region81: #{tpu_custom_call.1} parent=79 // pred_check
          %p856 = pneg %p226
        $region82: #{tpu_custom_call.1} parent=79 // pred_check_branch
          %858 = sbr.rel (%p856) target = $region84
        $region83: #{tpu_custom_call.1} parent=79 // pred_region
          %s859 = sand.u32 %s211, 1
          %s860 = scalar_lea.sflag [#allocation5], %s859
          %s861 = sand.u32 %s211, 1
          %s862 = smul.addr %s861, 32
          %s863 = scalar_lea.vmem [#allocation12], %s862
          %865 = dma.done %s860, 512
        $region84: #{tpu_custom_call.1} parent=79 // pred_fallthru
          _
      $region80: #{tpu_custom_call.1} parent=5 // pred_fallthru
        _
    $region6: #{tpu_custom_call.1} parent=1 // loop_footer
      %s25 = sadd.s32 1, %s21
    $region7: #{tpu_custom_call.1} parent=1 // loop_footer_branch
      %20 = sbr.rel target = $region3
    $region8: #{tpu_custom_call.1} parent=1 // loop_exit
      _
    %866 = vsyncpa [#allocation4], 1
    %s867 = scalar_lea.sflag [#allocation4], 1
    %868 = vsyncpa %s867, 1
    %869 = vsyncpa [#allocation7], 1
    %870 = vsyncpa [#allocation10], 1
    %871 = vsyncpa [#allocation5], 1
    %s872 = scalar_lea.sflag [#allocation5], 1
    %873 = vsyncpa %s872, 1

// kernel: tpu_custom_call.1
$region0: #{tpu_custom_call.1}
  #allocation0 [shape = 'u32[]', space=smem, size = 0x4, offset = 0x4, fixed_abs, tag = 'smem constant byte address 0x4 - core index']
  #allocation1 [shape = 'u32[72,128]{1,0:T(1,128)}', space=vmem, size = 0x9000, scoped, tag = 'internal scratch']
  #allocation2 [shape = 'bf16[8,128]{1,0:T(8,128)(2,1)}', space=vmem, size = 0x800, scoped, tag = 'scratch operand']
  %s0 = inlined_call_operand.hbm [shape: bf16[16,128], index: 0, kind: input, shape index: {}]
  %s1 = inlined_call_operand.hbm [shape: bf16[128,128], index: 1, kind: input, shape index: {}]
  %s2 = inlined_call_operand.vmem [shape: f32[1,128], index: 2, kind: input, shape index: {}]
  %s3 = inlined_call_operand.hbm [shape: f32[1,128], index: 3, kind: input, shape index: {}]
  %s4 = inlined_call_operand.hbm [shape: f32[1,128], index: 4, kind: input, shape index: {}]
  %s5 = inlined_call_operand.hbm [shape: bf16[128,512], index: 5, kind: input, shape index: {}]
  %s6 = inlined_call_operand.vmem [shape: f32[1,512], index: 6, kind: input, shape index: {}]
  %s7 = inlined_call_operand.hbm [shape: f32[16,512], index: 7, kind: output, shape index: {}]
  %s8 = sld [smem:[#allocation0]]
  $region85: #{tpu_custom_call.1} parent=0
    _
  %s10 = ssub.s32 1, %s8
  %s11 = scalar_select 0, %s10, %s8
  $region1: #{tpu_custom_call.1} parent=0
    #allocation3 [shape = 'u8[4096]{0}', space=vmem, size = 0x1000, scoped, tag = 'input window, operand 0']
    #allocation4 [shape = 's32[2]{0}', space=sflag, size = 0x8, scoped, tag = 'scoped memory for tpu_custom_call.1']
    #allocation5 [shape = 's32[2]{0}', space=sflag, size = 0x8, scoped, tag = 'scoped memory for tpu_custom_call.1']
    #allocation6 [shape = 'u8[32768]{0}', space=vmem, size = 0x8000, scoped, tag = 'input window, operand 1, single buffered']
    #allocation7 [shape = 's32[1]{0}', space=sflag, size = 0x4, scoped, tag = 'scoped memory for tpu_custom_call.1']
    #allocation8 [shape = 'u8[512]{0}', space=vmem, size = 0x400, scoped, tag = 'input window, operand 3, single buffered']
    #allocation9 [shape = 'u8[512]{0}', space=vmem, size = 0x400, scoped, tag = 'input window, operand 4, single buffered']
    #allocation10 [shape = 's32[1]{0}', space=sflag, size = 0x4, scoped, tag = 'scoped memory for tpu_custom_call.1']
    #allocation11 [shape = 'u8[131072]{0}', space=vmem, size = 0x20000, scoped, tag = 'input window, operand 5, single buffered']
    #allocation12 [shape = 'u8[32768]{0}', space=vmem, size = 0x8000, scoped, tag = 'output window, operand 0']
    %12 = vsyncpa [#allocation4], 0
    %s13 = scalar_lea.sflag [#allocation4], 1
    %14 = vsyncpa %s13, 0
    %15 = vsyncpa [#allocation7], 0
    %16 = vsyncpa [#allocation10], 0
    %17 = vsyncpa [#allocation5], 0
    %s18 = scalar_lea.sflag [#allocation5], 1
    %19 = vsyncpa %s18, 0
    loop: start=0, step=1, limit=4
    $region2: #{tpu_custom_call.1} parent=1 // loop_pre_header
      _
    $region3: #{tpu_custom_call.1} parent=1 // loop_header
      %s21 = sphi 0, %s25
      %p22 = scmp.ge.s32.totalorder %s21, 4
      %s28 = sphi 0, %s40
      %s29 = sphi 0, %s36
      %s30 = sphi 0, %s28
      %s31 = sphi 0, %s29
      %s32 = sphi 0, %s30
      %s33 = sphi 0, %s31
      %s43 = sphi 0, %s45
      %s46 = sphi 0, %s43
      %s47 = sphi 0, %s46
      %s63 = sphi 0, %s47
      %s67 = sphi 0, %s67
      %s69 = sphi 0, %s67
      %s70 = sphi 0, %s69
      %s84 = sphi 0, %s70
      %s88 = sphi 0, %s88
      %s90 = sphi 0, %s88
      %s91 = sphi 0, %s90
      %s105 = sphi 0, %s91
      %s109 = sphi 0, %s109
      %s111 = sphi 0, %s109
      %s112 = sphi 0, %s111
      %s126 = sphi 0, %s112
      %s130 = sphi 0, %s130
      %s132 = sphi 0, %s130
      %s133 = sphi 0, %s132
      %s147 = sphi 0, %s133
      %s153 = sphi 0, %s155
      %s156 = sphi 0, %s153
      %s157 = sphi 0, %s156
      %s173 = sphi 0, %s157
      %s179 = sphi 0, %s181
      %s182 = sphi 0, %s179
      %s183 = sphi 0, %s182
      %s199 = sphi 0, %s183
      %s207 = sphi 0, %s209
      %s210 = sphi 0, %s207
      %s211 = sphi 0, %s210
      %s227 = sphi 0, %s211
    $region4: #{tpu_custom_call.1} parent=1 // loop_header_branch
      %24 = sbr.rel (%p22) target = $region8
    $region5: #{tpu_custom_call.1} parent=1 // loop_body
      %s26 = ssub.s32 %s21, 1
      %s27 = ssub.s32 %s21, 2
      %s34 = sadd.s32 1, %s29
      %p35 = scmp.ge.s32.totalorder %s34, 1
      %s36 = scalar_select %p35, 0, %s34
      %s37 = sadd.s32 1, %s28
      %s38 = scalar_select %p35, %s37, %s28
      %p39 = scmp.ge.s32.totalorder %s38, 2
      %s40 = scalar_select %p39, 0, %s38
      %s41 = ssub.s32 %s28, %s40
      %p42 = scmp.eq.s32.totalorder %s41, 0
      %s44 = sadd.s32 %s43, 1
      %s45 = scalar_select %p42, %s43, %s44
      %p48 = pneg %p42
      %p49 = scmp.eq.s32.totalorder %s21, 1
      %p50 = por %p48, %p49
      %p51 = scmp.ne.s32.totalorder %s43, %s46
      %p52 = scmp.eq.s32.totalorder %s21, 0
      %p53 = por %p51, %p52
      %p54 = scmp.ne.s32.totalorder %s43, %s46
      %p55 = scmp.eq.s32.totalorder %s26, 1
      %p56 = por %p54, %p55
      %p57 = scmp.ne.s32.totalorder %s46, %s47
      %p58 = scmp.eq.s32.totalorder %s26, 0
      %p59 = por %p57, %p58
      %p60 = scmp.ne.s32.totalorder %s46, %s47
      %p61 = scmp.eq.s32.totalorder %s27, 1
      %p62 = por %p60, %p61
      %p64 = scmp.ne.s32.totalorder %s47, %s63
      %p65 = scmp.eq.s32.totalorder %s27, 0
      %p66 = por %p64, %p65
      %s68 = sadd.s32 %s67, 1
      %p71 = scmp.eq.s32.totalorder %s21, 1
      %p72 = scmp.ne.s32.totalorder %s67, %s69
      %p73 = scmp.eq.s32.totalorder %s21, 0
      %p74 = por %p72, %p73
      %p75 = scmp.ne.s32.totalorder %s67, %s69
      %p76 = scmp.eq.s32.totalorder %s26, 1
      %p77 = por %p75, %p76
      %p78 = scmp.ne.s32.totalorder %s69, %s70
      %p79 = scmp.eq.s32.totalorder %s26, 0
      %p80 = por %p78, %p79
      %p81 = scmp.ne.s32.totalorder %s69, %s70
      %p82 = scmp.eq.s32.totalorder %s27, 1
      %p83 = por %p81, %p82
      %p85 = scmp.ne.s32.totalorder %s70, %s84
      %p86 = scmp.eq.s32.totalorder %s27, 0
      %p87 = por %p85, %p86
      %s89 = sadd.s32 %s88, 1
      %p92 = scmp.eq.s32.totalorder %s21, 1
      %p93 = scmp.ne.s32.totalorder %s88, %s90
      %p94 = scmp.eq.s32.totalorder %s21, 0
      %p95 = por %p93, %p94
      %p96 = scmp.ne.s32.totalorder %s88, %s90
      %p97 = scmp.eq.s32.totalorder %s26, 1
      %p98 = por %p96, %p97
      %p99 = scmp.ne.s32.totalorder %s90, %s91
      %p100 = scmp.eq.s32.totalorder %s26, 0
      %p101 = por %p99, %p100
      %p102 = scmp.ne.s32.totalorder %s90, %s91
      %p103 = scmp.eq.s32.totalorder %s27, 1
      %p104 = por %p102, %p103
      %p106 = scmp.ne.s32.totalorder %s91, %s105
      %p107 = scmp.eq.s32.totalorder %s27, 0
      %p108 = por %p106, %p107
      %s110 = sadd.s32 %s109, 1
      %p113 = scmp.eq.s32.totalorder %s21, 1
      %p114 = scmp.ne.s32.totalorder %s109, %s111
      %p115 = scmp.eq.s32.totalorder %s21, 0
      %p116 = por %p114, %p115
      %p117 = scmp.ne.s32.totalorder %s109, %s111
      %p118 = scmp.eq.s32.totalorder %s26, 1
      %p119 = por %p117, %p118
      %p120 = scmp.ne.s32.totalorder %s111, %s112
      %p121 = scmp.eq.s32.totalorder %s26, 0
      %p122 = por %p120, %p121
      %p123 = scmp.ne.s32.totalorder %s111, %s112
      %p124 = scmp.eq.s32.totalorder %s27, 1
      %p125 = por %p123, %p124
      %p127 = scmp.ne.s32.totalorder %s112, %s126
      %p128 = scmp.eq.s32.totalorder %s27, 0
      %p129 = por %p127, %p128
      %s131 = sadd.s32 %s130, 1
      %p134 = scmp.eq.s32.totalorder %s21, 1
      %p135 = scmp.ne.s32.totalorder %s130, %s132
      %p136 = scmp.eq.s32.totalorder %s21, 0
      %p137 = por %p135, %p136
      %p138 = scmp.ne.s32.totalorder %s130, %s132
      %p139 = scmp.eq.s32.totalorder %s26, 1
      %p140 = por %p138, %p139
      %p141 = scmp.ne.s32.totalorder %s132, %s133
      %p142 = scmp.eq.s32.totalorder %s26, 0
      %p143 = por %p141, %p142
      %p144 = scmp.ne.s32.totalorder %s132, %s133
      %p145 = scmp.eq.s32.totalorder %s27, 1
      %p146 = por %p144, %p145
      %p148 = scmp.ne.s32.totalorder %s133, %s147
      %p149 = scmp.eq.s32.totalorder %s27, 0
      %p150 = por %p148, %p149
      %s151 = ssub.s32 %s29, %s36
      %p152 = scmp.eq.s32.totalorder %s151, 0
      %s154 = sadd.s32 %s153, 1
      %s155 = scalar_select %p152, %s153, %s154
      %p158 = pneg %p152
      %p159 = scmp.eq.s32.totalorder %s21, 1
      %p160 = por %p158, %p159
      %p161 = scmp.ne.s32.totalorder %s153, %s156
      %p162 = scmp.eq.s32.totalorder %s21, 0
      %p163 = por %p161, %p162
      %p164 = scmp.ne.s32.totalorder %s153, %s156
      %p165 = scmp.eq.s32.totalorder %s26, 1
      %p166 = por %p164, %p165
      %p167 = scmp.ne.s32.totalorder %s156, %s157
      %p168 = scmp.eq.s32.totalorder %s26, 0
      %p169 = por %p167, %p168
      %p170 = scmp.ne.s32.totalorder %s156, %s157
      %p171 = scmp.eq.s32.totalorder %s27, 1
      %p172 = por %p170, %p171
      %p174 = scmp.ne.s32.totalorder %s157, %s173
      %p175 = scmp.eq.s32.totalorder %s27, 0
      %p176 = por %p174, %p175
      %s177 = ssub.s32 %s29, %s36
      %p178 = scmp.eq.s32.totalorder %s177, 0
      %s180 = sadd.s32 %s179, 1
      %s181 = scalar_select %p178, %s179, %s180
      %p184 = pneg %p178
      %p185 = scmp.eq.s32.totalorder %s21, 1
      %p186 = por %p184, %p185
      %p187 = scmp.ne.s32.totalorder %s179, %s182
      %p188 = scmp.eq.s32.totalorder %s21, 0
      %p189 = por %p187, %p188
      %p190 = scmp.ne.s32.totalorder %s179, %s182
      %p191 = scmp.eq.s32.totalorder %s26, 1
      %p192 = por %p190, %p191
      %p193 = scmp.ne.s32.totalorder %s182, %s183
      %p194 = scmp.eq.s32.totalorder %s26, 0
      %p195 = por %p193, %p194
      %p196 = scmp.ne.s32.totalorder %s182, %s183
      %p197 = scmp.eq.s32.totalorder %s27, 1
      %p198 = por %p196, %p197
      %p200 = scmp.ne.s32.totalorder %s183, %s199
      %p201 = scmp.eq.s32.totalorder %s27, 0
      %p202 = por %p200, %p201
      %s203 = ssub.s32 %s28, %s40
      %s204 = ssub.s32 %s29, %s36
      %s205 = sor.u32 %s203, %s204
      %p206 = scmp.eq.s32.totalorder %s205, 0
      %s208 = sadd.s32 %s207, 1
      %s209 = scalar_select %p206, %s207, %s208
      %p212 = pneg %p206
      %p213 = scmp.eq.s32.totalorder %s21, 1
      %p214 = por %p212, %p213
      %p215 = scmp.ne.s32.totalorder %s207, %s210
      %p216 = scmp.eq.s32.totalorder %s21, 0
      %p217 = por %p215, %p216
      %p218 = scmp.ne.s32.totalorder %s207, %s210
      %p219 = scmp.eq.s32.totalorder %s26, 1
      %p220 = por %p218, %p219
      %p221 = scmp.ne.s32.totalorder %s210, %s211
      %p222 = scmp.eq.s32.totalorder %s26, 0
      %p223 = por %p221, %p222
      %p224 = scmp.ne.s32.totalorder %s210, %s211
      %p225 = scmp.eq.s32.totalorder %s27, 1
      %p226 = por %p224, %p225
      %p228 = scmp.ne.s32.totalorder %s211, %s227
      %p229 = scmp.eq.s32.totalorder %s27, 0
      %p230 = por %p228, %p229
      %p231 = scmp.le.s32.totalorder 1, %s21
      %p232 = scmp.lt.s32.totalorder %s21, 3
      %p233 = pnand %p231, %p232
      %p234 = pneg %p233
      // Predicated region
      $region9: #{tpu_custom_call.1} parent=5 // pred_check
        _
      $region10: #{tpu_custom_call.1} parent=5 // pred_check_branch
        %236 = sbr.rel (%p233) target = $region12
      $region11: #{tpu_custom_call.1} parent=5 // pred_region
        %s237 = ssub.s32 %s21, 1
        // Predicated region
        $region13: #{tpu_custom_call.1} parent=11 // pred_check
          %p238 = pneg %p80
        $region14: #{tpu_custom_call.1} parent=11 // pred_check_branch
          %240 = sbr.rel (%p238) target = $region16
        $region15: #{tpu_custom_call.1} parent=11 // pred_region
          %242 = vsyncadd [#allocation7], 0
          %s243 = sshll.u32 %s1, 4
          %s244 = int_to_ptr.hbm [resolvable:$true] %s243
          %s245 = sshll.u32 [#allocation6], 4
          %s246 = int_to_ptr.vmem [resolvable:$true] %s245
          %251 = dma.hbm_to_vmem [thread:$0]  %s244, 1024, %s246, [#allocation7], 64, 64, 4
        $region16: #{tpu_custom_call.1} parent=11 // pred_fallthru
          _
        // Predicated region
        $region17: #{tpu_custom_call.1} parent=11 // pred_check
          %p252 = pneg %p101
        $region18: #{tpu_custom_call.1} parent=11 // pred_check_branch
          %254 = sbr.rel (%p252) target = $region20
        $region19: #{tpu_custom_call.1} parent=11 // pred_region
          _
        $region20: #{tpu_custom_call.1} parent=11 // pred_fallthru
          _
        // Predicated region
        $region21: #{tpu_custom_call.1} parent=11 // pred_check
          %p255 = pneg %p122
        $region22: #{tpu_custom_call.1} parent=11 // pred_check_branch
          %257 = sbr.rel (%p255) target = $region24
        $region23: #{tpu_custom_call.1} parent=11 // pred_region
          %259 = vsyncadd [#allocation7], 0
          %s261 = sshll.u32 %s3, 4
          %s262 = int_to_ptr.hbm [resolvable:$true] %s261
          %s263 = sshll.u32 [#allocation8], 4
          %s264 = int_to_ptr.vmem [resolvable:$true] %s263
          %266 = dma.hbm_to_vmem [thread:$0]  %s262, 16, %s264, [#allocation7]
        $region24: #{tpu_custom_call.1} parent=11 // pred_fallthru
          _
        // Predicated region
        $region25: #{tpu_custom_call.1} parent=11 // pred_check
          %p267 = pneg %p143
        $region26: #{tpu_custom_call.1} parent=11 // pred_check_branch
          %269 = sbr.rel (%p267) target = $region28
        $region27: #{tpu_custom_call.1} parent=11 // pred_region
          %271 = vsyncadd [#allocation10], 0
          %s273 = sshll.u32 %s4, 4
          %s274 = int_to_ptr.hbm [resolvable:$true] %s273
          %s275 = sshll.u32 [#allocation9], 4
          %s276 = int_to_ptr.vmem [resolvable:$true] %s275
          %278 = dma.hbm_to_vmem [thread:$0]  %s274, 16, %s276, [#allocation10]
        $region28: #{tpu_custom_call.1} parent=11 // pred_fallthru
          _
        // Predicated region
        $region29: #{tpu_custom_call.1} parent=11 // pred_check
          %p279 = pneg %p169
        $region30: #{tpu_custom_call.1} parent=11 // pred_check_branch
          %281 = sbr.rel (%p279) target = $region32
        $region31: #{tpu_custom_call.1} parent=11 // pred_region
          %s282 = smul.u32 4, %s31
          %284 = vsyncadd [#allocation10], 0
          %s285 = smul.addr %s282, 4
          %s286 = scalar_lea.hbm %s5, %s285
          %s287 = sshll.u32 %s286, 4
          %s288 = int_to_ptr.hbm [resolvable:$true] %s287
          %s289 = sshll.u32 [#allocation11], 4
          %s290 = int_to_ptr.vmem [resolvable:$true] %s289
          %295 = dma.hbm_to_vmem [thread:$0]  %s288, 4096, %s290, [#allocation10], 256, 256, 16
        $region32: #{tpu_custom_call.1} parent=11 // pred_fallthru
          _
        // Predicated region
        $region33: #{tpu_custom_call.1} parent=11 // pred_check
          %p296 = pneg %p195
        $region34: #{tpu_custom_call.1} parent=11 // pred_check_branch
          %298 = sbr.rel (%p296) target = $region36
        $region35: #{tpu_custom_call.1} parent=11 // pred_region
          %s299 = smul.u32 4, %s31
          %p300 = scmp.lt.s32.totalorder %s299, 3
          %s301 = scalar_select %p300, %s299, 3
          %s302 = scalar_lea.vmem %s6, %s301
          %s303 = smul.u32 4, %s31
        $region36: #{tpu_custom_call.1} parent=11 // pred_fallthru
          _
      $region12: #{tpu_custom_call.1} parent=5 // pred_fallthru
        _
      %p304 = scmp.lt.s32.totalorder %s21, 2
      // Predicated region
      $region37: #{tpu_custom_call.1} parent=5 // pred_check
        %p305 = pneg %p304
      $region38: #{tpu_custom_call.1} parent=5 // pred_check_branch
        %307 = sbr.rel (%p305) target = $region40
      $region39: #{tpu_custom_call.1} parent=5 // pred_region
        // Predicated region
        $region41: #{tpu_custom_call.1} parent=39 // pred_check
          %p308 = pneg %p53
        $region42: #{tpu_custom_call.1} parent=39 // pred_check_branch
          %310 = sbr.rel (%p308) target = $region44
        $region43: #{tpu_custom_call.1} parent=39 // pred_region
          %s311 = sand.u32 %s43, 1
          %s312 = scalar_lea.sflag [#allocation4], %s311
          %s313 = sand.u32 %s43, 1
          %s314 = smul.addr %s313, 4
          %s315 = scalar_lea.vmem [#allocation3], %s314
          %317 = vsyncadd %s312, 0
          %s318 = smul.addr %s28, 4
          %s319 = scalar_lea.hbm %s0, %s318
          %s321 = sshll.u32 %s319, 4
          %s322 = int_to_ptr.hbm [resolvable:$true] %s321
          %s323 = sshll.u32 %s315, 4
          %s324 = int_to_ptr.vmem [resolvable:$true] %s323
          %326 = dma.hbm_to_vmem [thread:$0]  %s322, 64, %s324, %s312
        $region44: #{tpu_custom_call.1} parent=39 // pred_fallthru
          _
      $region40: #{tpu_custom_call.1} parent=5 // pred_fallthru
        _
      %p327 = scmp.le.s32.totalorder 1, %s21
      %p328 = scmp.lt.s32.totalorder %s21, 3
      %p329 = pnand %p327, %p328
      %p330 = pneg %p329
      // Predicated region
      $region45: #{tpu_custom_call.1} parent=5 // pred_check
        _
      $region46: #{tpu_custom_call.1} parent=5 // pred_check_branch
        %332 = sbr.rel (%p329) target = $region48
      $region47: #{tpu_custom_call.1} parent=5 // pred_region
        %s333 = ssub.s32 %s21, 1
        %s334 = sand.u32 %s46, 1
        %s335 = scalar_lea.sflag [#allocation4], %s334
        %s336 = sand.u32 %s46, 1
        %s337 = smul.addr %s336, 4
        %s338 = scalar_lea.vmem [#allocation3], %s337
        // Predicated region
        $region49: #{tpu_custom_call.1} parent=47 // pred_check
          %p339 = pneg %p59
        $region50: #{tpu_custom_call.1} parent=47 // pred_check_branch
          %341 = sbr.rel (%p339) target = $region52
        $region51: #{tpu_custom_call.1} parent=47 // pred_region
          %343 = dma.done %s335, 64
        $region52: #{tpu_custom_call.1} parent=47 // pred_fallthru
          _
        // Predicated region
        $region53: #{tpu_custom_call.1} parent=47 // pred_check
          %p344 = pneg %p80
        $region54: #{tpu_custom_call.1} parent=47 // pred_check_branch
          %346 = sbr.rel (%p344) target = $region56
        $region55: #{tpu_custom_call.1} parent=47 // pred_region
          %348 = dma.done [#allocation7], 1024
        $region56: #{tpu_custom_call.1} parent=47 // pred_fallthru
          _
        // Predicated region
        $region57: #{tpu_custom_call.1} parent=47 // pred_check
          %p349 = pneg %p122
        $region58: #{tpu_custom_call.1} parent=47 // pred_check_branch
          %351 = sbr.rel (%p349) target = $region60
        $region59: #{tpu_custom_call.1} parent=47 // pred_region
          %353 = dma.done [#allocation7], 16
        $region60: #{tpu_custom_call.1} parent=47 // pred_fallthru
          _
        // Predicated region
        $region61: #{tpu_custom_call.1} parent=47 // pred_check
          %p354 = pneg %p143
        $region62: #{tpu_custom_call.1} parent=47 // pred_check_branch
          %356 = sbr.rel (%p354) target = $region64
        $region63: #{tpu_custom_call.1} parent=47 // pred_region
          %358 = dma.done [#allocation10], 16
        $region64: #{tpu_custom_call.1} parent=47 // pred_fallthru
          _
        // Predicated region
        $region65: #{tpu_custom_call.1} parent=47 // pred_check
          %p359 = pneg %p169
        $region66: #{tpu_custom_call.1} parent=47 // pred_check_branch
          %361 = sbr.rel (%p359) target = $region68
        $region67: #{tpu_custom_call.1} parent=47 // pred_region
          %363 = dma.done [#allocation10], 4096
        $region68: #{tpu_custom_call.1} parent=47 // pred_fallthru
          _
        %s364 = sand.u32 %s46, 1
        %s365 = scalar_lea.sflag [#allocation4], %s364
        %s366 = sand.u32 %s46, 1
        %s367 = smul.addr %s366, 4
        %s368 = scalar_lea.vmem [#allocation3], %s367
        %p369 = pneg %p59
        %p370 = pneg %p56
        %p371 = pneg %p80
        %p372 = pneg %p77
        %p373 = pneg %p101
        %p374 = pneg %p98
        %p375 = pneg %p122
        %p376 = pneg %p119
        %p377 = pneg %p143
        %p378 = pneg %p140
        %p379 = pneg %p169
        %p380 = pneg %p166
        %s381 = smul.u32 4, %s31
        %p382 = scmp.lt.s32.totalorder %s381, 3
        %s383 = scalar_select %p382, %s381, 3
        %s384 = scalar_lea.vmem %s6, %s383
        %p385 = pneg %p195
        %p386 = pneg %p192
        %p387 = pneg %p223
        %p388 = pneg %p220
        %s389 = sand.u32 %s210, 1
        %s390 = scalar_lea.sflag [#allocation5], %s389
        %s391 = sand.u32 %s210, 1
        %s392 = smul.addr %s391, 32
        %s393 = scalar_lea.vmem [#allocation12], %s392
        %s394 = smul.u32 4, %s31
        %s395 = smul.u32 4, %s31
        %p396 = scmp.lt.s32.totalorder %s395, 3
        %s397 = scalar_select %p396, %s395, 3
        %s398 = scalar_lea.vmem %s6, %s397
        %s399 = smul.u32 4, %s31
        %s400 = smul.u32 4, %s31
        %p401 = scmp.eq.s32.totalorder %s31, 0
        // Predicated region
        $region69: #{tpu_custom_call.1} parent=47 // pred_check
          %p402 = pneg %p401
        $region70: #{tpu_custom_call.1} parent=47 // pred_check_branch
          %404 = sbr.rel (%p402) target = $region72
        $region71: #{tpu_custom_call.1} parent=47 // pred_region
          %v405 = vld [vmem:[%s338] sm:$0xf]
          %v406 = vld [vmem:[#allocation6] sm:$0xf]
          %v407 = vld [vmem:[#allocation6 + $0x4] sm:$0xf]
          %v408 = vld [vmem:[#allocation6 + $0x8] sm:$0xf]
          %v409 = vld [vmem:[#allocation6 + $0xc] sm:$0xf]
          %v410 = vld [vmem:[#allocation6 + $0x10] sm:$0xf]
          %v411 = vld [vmem:[#allocation6 + $0x14] sm:$0xf]
          %v412 = vld [vmem:[#allocation6 + $0x18] sm:$0xf]
          %v413 = vld [vmem:[#allocation6 + $0x1c] sm:$0xf]
          %v414 = vld [vmem:[#allocation6 + $0x20] sm:$0xf]
          %v415 = vld [vmem:[#allocation6 + $0x24] sm:$0xf]
          %v416 = vld [vmem:[#allocation6 + $0x28] sm:$0xf]
          %v417 = vld [vmem:[#allocation6 + $0x2c] sm:$0xf]
          %v418 = vld [vmem:[#allocation6 + $0x30] sm:$0xf]
          %v419 = vld [vmem:[#allocation6 + $0x34] sm:$0xf]
          %v420 = vld [vmem:[#allocation6 + $0x38] sm:$0xf]
          %v421 = vld [vmem:[#allocation6 + $0x3c] sm:$0xf]
          %v422 = vld [vmem:[%s2] sm:$0x1]
          %v424 = vperm.slane %v422, 0
          %v442 = vunpack.c.l.b16 %v406
          %v443 = vunpack.c.l.b16 %v407
          %v444 = vunpack.c.l.b16 %v408
          %v445 = vunpack.c.l.b16 %v409
          %v446 = vunpack.c.l.b16 %v410
          %v447 = vunpack.c.l.b16 %v411
          %v448 = vunpack.c.l.b16 %v412
          %v449 = vunpack.c.l.b16 %v413
          %v450 = vunpack.c.l.b16 %v414
          %v451 = vunpack.c.l.b16 %v415
          %v452 = vunpack.c.l.b16 %v416
          %v453 = vunpack.c.l.b16 %v417
          %v454 = vunpack.c.l.b16 %v418
          %v455 = vunpack.c.l.b16 %v419
          %v456 = vunpack.c.l.b16 %v420
          %v457 = vunpack.c.l.b16 %v421
          %v458 = vpack.c.b16 %v443, %v442
          %v459 = vpack.c.b16 %v445, %v444
          %v460 = vpack.c.b16 %v447, %v446
          %v461 = vpack.c.b16 %v449, %v448
          %v462 = vpack.c.b16 %v451, %v450
          %v463 = vpack.c.b16 %v453, %v452
          %v464 = vpack.c.b16 %v455, %v454
          %v465 = vpack.c.b16 %v457, %v456
          %474 = vmatpush.bf16.msra.mxu0 %v465
          %475 = vmatpush.bf16.msra.mxu0 %v464
          %476 = vmatpush.bf16.msra.mxu0 %v463
          %477 = vmatpush.bf16.msra.mxu0 %v462
          %478 = vmatpush.bf16.msra.mxu0 %v461
          %479 = vmatpush.bf16.msra.mxu0 %v460
          %480 = vmatpush.bf16.msra.mxu0 %v459
          %481 = vmatpush.bf16.msra.mxu0 %v458
          %482 = vmatmul.bf16.gmra.mxu0 %v405
          %v483 = vpop.f32.mrf.mxu0
          %v484 = vadd.f32 %v424, %v483
          %v485 = vpop.f32.mrf.mxu0
          %486 = vdwg.mxu0
          %v487 = vmul.f32 %v484, 0.5
          %v488 = vmul.f32 %v484, 0.70710677
          %v489 = vmul.f32 %v488, %v488
          %v490 = vmin.f32 16.0, %v489
          %v491 = vmul.f32 %v490, 2.1237322e-06
          %v492 = vadd.f32 %v491, 0.00028619796
          %v493 = vmul.f32 %v490, %v492
          %v494 = vadd.f32 %v493, 0.0036580483
          %v495 = vmul.f32 %v490, %v494
          %v496 = vadd.f32 %v495, 0.05243302
          %v497 = vmul.f32 %v490, %v496
          %v498 = vadd.f32 %v497, 0.18741608
          %v499 = vmul.f32 %v490, %v498
          %v500 = vadd.f32 %v499, 1.1283791
          %v501 = vmul.f32 %v488, %v500
          %v502 = vmul.f32 %v490, 3.8918573e-05
          %v503 = vadd.f32 %v502, 0.001143296
          %v504 = vmul.f32 %v490, %v503
          %v505 = vadd.f32 %v504, 0.014752088
          %v506 = vmul.f32 %v490, %v505
          %v507 = vadd.f32 %v506, 0.112945676
          %v508 = vmul.f32 %v490, %v507
          %v509 = vadd.f32 %v508, 0.4994258
          %v510 = vmul.f32 %v490, %v509
          %v511 = vadd.f32 %v510, 1.0
          %v512 = vrcp.pop %v511
          %v513 = vmul.f32 %v511, %v512
          %v514 = vsub.f32 1.0, %v513
          %v515 = vmul.f32 %v512, %v514
          %v516 = vadd.f32 %v512, %v515
          %vm517 = vweird.f32 %v511
          %vm518 = vweird.f32 %v512
          %vm519 = vmor %vm517, %vm518
          %v520 = vsel %vm519, %v512, %v516
          %v521 = vand.u32 2147483647, %v511
          %vm522 = vcmp.eq.f32.partialorder %v521, 8.507059e+37
          %v523 = vand.u32 %v511, 2147483648
          %v524 = vor.u32 1.1754944e-38, %v523
          %v525 = vsel %vm522, %v524, %v520
          %v526 = vmul.f32 %v501, %v525
          %v527 = vmin.f32 %v526, 1.0
          %v528 = vmax.f32 %v527, -1.0
          %v529 = vadd.f32 %v528, 1.0
          %v530 = vmul.f32 %v487, %v529
          %531 = vadd.xlane.f32.xlu0 %v530
          %v532 = vpop.xlane.xlu0 %531
          %v533 = vrcp.pop 128.0
          %v534 = vmul.f32 128.0, %v533
          %v535 = vsub.f32 1.0, %v534
          %v536 = vmul.f32 %v533, %v535
          %v537 = vadd.f32 %v533, %v536
          %vm538 = vweird.f32 %v533
          %v539 = vsel %vm538, %v533, %v537
          %v540 = vmul.f32 %v532, %v539
          %v541 = vsub.f32 %v530, %v540
          %v542 = vmul.f32 %v541, %v541
          %543 = vadd.xlane.f32.xlu0 %v542
          %v544 = vpop.xlane.xlu0 %543
          %v545 = vmul.f32 %v544, %v539
          %v546 = vadd.f32 %v545, 1e-12
          %v547 = vrsqrt.pop %v546
          %v548 = vmul.f32 %v547, %v546
          %v549 = vmul.f32 %v548, %v547
          %v550 = vmul.f32 0.5, %v549
          %v551 = vsub.f32 1.5, %v550
          %v552 = vmul.f32 %v547, %v551
          %vm553 = vweird.f32 %v546
          %vm554 = vweird.f32 %v547
          %vm555 = vmor %vm553, %vm554
          %v556 = vsel %vm555, %v547, %v552
          %v557 = vmul.f32 %v541, %v556
          %v558 = vld [vmem:[#allocation8] sm:$0x1]
          %v560 = vperm.slane %v558, 0
          %v562 = vmul.f32 %v557, %v560
          %v563 = vld [vmem:[#allocation9] sm:$0x1]
          %v565 = vperm.slane %v563, 0
          %v567 = vadd.f32 %v562, %v565
          %v568 = vpack.c.bf16 %v567, %v567
          %569 = vst [vmem:[#allocation2] sm:$0xf] %v568
        $region72: #{tpu_custom_call.1} parent=47 // pred_fallthru
          _
        %v570 = vld [vmem:[#allocation2] sm:$0xf]
        %v571 = vld [vmem:[#allocation11] sm:$0xff]
        %v572 = vld [vmem:[#allocation11 + $0x8] sm:$0xff]
        %v573 = vld [vmem:[#allocation11 + $0x10] sm:$0xff]
        %v574 = vld [vmem:[#allocation11 + $0x18] sm:$0xff]
        %v575 = vld [vmem:[#allocation11 + $0x20] sm:$0xff]
        %v576 = vld [vmem:[#allocation11 + $0x28] sm:$0xff]
        %v577 = vld [vmem:[#allocation11 + $0x30] sm:$0xff]
        %v578 = vld [vmem:[#allocation11 + $0x38] sm:$0xff]
        %v579 = vld [vmem:[#allocation11 + $0x40] sm:$0xff]
        %v580 = vld [vmem:[#allocation11 + $0x48] sm:$0xff]
        %v581 = vld [vmem:[#allocation11 + $0x50] sm:$0xff]
        %v582 = vld [vmem:[#allocation11 + $0x58] sm:$0xff]
        %v583 = vld [vmem:[#allocation11 + $0x60] sm:$0xff]
        %v584 = vld [vmem:[#allocation11 + $0x68] sm:$0xff]
        %v585 = vld [vmem:[#allocation11 + $0x70] sm:$0xff]
        %v586 = vld [vmem:[#allocation11 + $0x78] sm:$0xff]
        %v587 = vld [vmem:[#allocation11 + $0x80] sm:$0xff]
        %v588 = vld [vmem:[#allocation11 + $0x88] sm:$0xff]
        %v589 = vld [vmem:[#allocation11 + $0x90] sm:$0xff]
        %v590 = vld [vmem:[#allocation11 + $0x98] sm:$0xff]
        %v591 = vld [vmem:[#allocation11 + $0xa0] sm:$0xff]
        %v592 = vld [vmem:[#allocation11 + $0xa8] sm:$0xff]
        %v593 = vld [vmem:[#allocation11 + $0xb0] sm:$0xff]
        %v594 = vld [vmem:[#allocation11 + $0xb8] sm:$0xff]
        %v595 = vld [vmem:[#allocation11 + $0xc0] sm:$0xff]
        %v596 = vld [vmem:[#allocation11 + $0xc8] sm:$0xff]
        %v597 = vld [vmem:[#allocation11 + $0xd0] sm:$0xff]
        %v598 = vld [vmem:[#allocation11 + $0xd8] sm:$0xff]
        %v599 = vld [vmem:[#allocation11 + $0xe0] sm:$0xff]
        %v600 = vld [vmem:[#allocation11 + $0xe8] sm:$0xff]
        %v601 = vld [vmem:[#allocation11 + $0xf0] sm:$0xff]
        %v602 = vld [vmem:[#allocation11 + $0xf8] sm:$0xff]
        %v603 = vld [vmem:[%s398] sm:$0xf]
        %v605 = vperm.slane %v603, 0
        %v606 = vperm.slane %v603, 1
        %v607 = vperm.slane %v603, 2
        %v608 = vperm.slane %v603, 3
        %v645 = vunpack.c.l.b16 %v571
        %v646 = vunpack.c.h.b16 %v571
        %v647 = vunpack.c.l.b16 %v572
        %v648 = vunpack.c.h.b16 %v572
        %v649 = vunpack.c.l.b16 %v573
        %v650 = vunpack.c.h.b16 %v573
        %v651 = vunpack.c.l.b16 %v574
        %v652 = vunpack.c.h.b16 %v574
        %v653 = vunpack.c.l.b16 %v575
        %v654 = vunpack.c.h.b16 %v575
        %v655 = vunpack.c.l.b16 %v576
        %v656 = vunpack.c.h.b16 %v576
        %v657 = vunpack.c.l.b16 %v577
        %v658 = vunpack.c.h.b16 %v577
        %v659 = vunpack.c.l.b16 %v578
        %v660 = vunpack.c.h.b16 %v578
        %v661 = vunpack.c.l.b16 %v579
        %v662 = vunpack.c.h.b16 %v579
        %v663 = vunpack.c.l.b16 %v580
        %v664 = vunpack.c.h.b16 %v580
        %v665 = vunpack.c.l.b16 %v581
        %v666 = vunpack.c.h.b16 %v581
        %v667 = vunpack.c.l.b16 %v582
        %v668 = vunpack.c.h.b16 %v582
        %v669 = vunpack.c.l.b16 %v583
        %v670 = vunpack.c.h.b16 %v583
        %v671 = vunpack.c.l.b16 %v584
        %v672 = vunpack.c.h.b16 %v584
        %v673 = vunpack.c.l.b16 %v585
        %v674 = vunpack.c.h.b16 %v585
        %v675 = vunpack.c.l.b16 %v586
        %v676 = vunpack.c.h.b16 %v586
        %v677 = vunpack.c.l.b16 %v587
        %v678 = vunpack.c.h.b16 %v587
        %v679 = vunpack.c.l.b16 %v588
        %v680 = vunpack.c.h.b16 %v588
        %v681 = vunpack.c.l.b16 %v589
        %v682 = vunpack.c.h.b16 %v589
        %v683 = vunpack.c.l.b16 %v590
        %v684 = vunpack.c.h.b16 %v590
        %v685 = vunpack.c.l.b16 %v591
        %v686 = vunpack.c.h.b16 %v591
        %v687 = vunpack.c.l.b16 %v592
        %v688 = vunpack.c.h.b16 %v592
        %v689 = vunpack.c.l.b16 %v593
        %v690 = vunpack.c.h.b16 %v593
        %v691 = vunpack.c.l.b16 %v594
        %v692 = vunpack.c.h.b16 %v594
        %v693 = vunpack.c.l.b16 %v595
        %v694 = vunpack.c.h.b16 %v595
        %v695 = vunpack.c.l.b16 %v596
        %v696 = vunpack.c.h.b16 %v596
        %v697 = vunpack.c.l.b16 %v597
        %v698 = vunpack.c.h.b16 %v597
        %v699 = vunpack.c.l.b16 %v598
        %v700 = vunpack.c.h.b16 %v598
        %v701 = vunpack.c.l.b16 %v599
        %v702 = vunpack.c.h.b16 %v599
        %v703 = vunpack.c.l.b16 %v600
        %v704 = vunpack.c.h.b16 %v600
        %v705 = vunpack.c.l.b16 %v601
        %v706 = vunpack.c.h.b16 %v601
        %v707 = vunpack.c.l.b16 %v602
        %v708 = vunpack.c.h.b16 %v602
        %v709 = vpack.c.b16 %v649, %v645
        %v710 = vpack.c.b16 %v650, %v646
        %v711 = vpack.c.b16 %v651, %v647
        %v712 = vpack.c.b16 %v652, %v648
        %v713 = vpack.c.b16 %v657, %v653
        %v714 = vpack.c.b16 %v658, %v654
        %v715 = vpack.c.b16 %v659, %v655
        %v716 = vpack.c.b16 %v660, %v656
        %v717 = vpack.c.b16 %v665, %v661
        %v718 = vpack.c.b16 %v666, %v662
        %v719 = vpack.c.b16 %v667, %v663
        %v720 = vpack.c.b16 %v668, %v664
        %v721 = vpack.c.b16 %v673, %v669
        %v722 = vpack.c.b16 %v674, %v670
        %v723 = vpack.c.b16 %v675, %v671
        %v724 = vpack.c.b16 %v676, %v672
        %v725 = vpack.c.b16 %v681, %v677
        %v726 = vpack.c.b16 %v682, %v678
        %v727 = vpack.c.b16 %v683, %v679
        %v728 = vpack.c.b16 %v684, %v680
        %v729 = vpack.c.b16 %v689, %v685
        %v730 = vpack.c.b16 %v690, %v686
        %v731 = vpack.c.b16 %v691, %v687
        %v732 = vpack.c.b16 %v692, %v688
        %v733 = vpack.c.b16 %v697, %v693
        %v734 = vpack.c.b16 %v698, %v694
        %v735 = vpack.c.b16 %v699, %v695
        %v736 = vpack.c.b16 %v700, %v696
        %v737 = vpack.c.b16 %v705, %v701
        %v738 = vpack.c.b16 %v706, %v702
        %v739 = vpack.c.b16 %v707, %v703
        %v740 = vpack.c.b16 %v708, %v704
        %773 = vmatpush.bf16.msra.mxu0 %v737
        %774 = vmatpush.bf16.msra.mxu0 %v733
        %775 = vmatpush.bf16.msra.mxu0 %v729
        %776 = vmatpush.bf16.msra.mxu0 %v725
        %777 = vmatpush.bf16.msra.mxu0 %v721
        %778 = vmatpush.bf16.msra.mxu0 %v717
        %779 = vmatpush.bf16.msra.mxu0 %v713
        %780 = vmatpush.bf16.msra.mxu0 %v709
        %781 = vmatmul.bf16.gmra.mxu0 %v570
        %v782 = vpop.f32.mrf.mxu0
        %v783 = vadd.f32 %v605, %v782
        %v784 = vpop.f32.mrf.mxu0
        %785 = vdwg.mxu0
        %786 = vmatpush.bf16.msra.mxu0 %v738
        %787 = vmatpush.bf16.msra.mxu0 %v734
        %788 = vmatpush.bf16.msra.mxu0 %v730
        %789 = vmatpush.bf16.msra.mxu0 %v726
        %790 = vmatpush.bf16.msra.mxu0 %v722
        %791 = vmatpush.bf16.msra.mxu0 %v718
        %792 = vmatpush.bf16.msra.mxu0 %v714
        %793 = vmatpush.bf16.msra.mxu0 %v710
        %794 = vmatmul.bf16.gmra.mxu0 %v570
        %v795 = vpop.f32.mrf.mxu0
        %v796 = vadd.f32 %v606, %v795
        %v797 = vpop.f32.mrf.mxu0
        %798 = vdwg.mxu0
        %799 = vmatpush.bf16.msra.mxu0 %v739
        %800 = vmatpush.bf16.msra.mxu0 %v735
        %801 = vmatpush.bf16.msra.mxu0 %v731
        %802 = vmatpush.bf16.msra.mxu0 %v727
        %803 = vmatpush.bf16.msra.mxu0 %v723
        %804 = vmatpush.bf16.msra.mxu0 %v719
        %805 = vmatpush.bf16.msra.mxu0 %v715
        %806 = vmatpush.bf16.msra.mxu0 %v711
        %807 = vmatmul.bf16.gmra.mxu0 %v570
        %v808 = vpop.f32.mrf.mxu0
        %v809 = vadd.f32 %v607, %v808
        %v810 = vpop.f32.mrf.mxu0
        %811 = vdwg.mxu0
        %812 = vmatpush.bf16.msra.mxu0 %v740
        %813 = vmatpush.bf16.msra.mxu0 %v736
        %814 = vmatpush.bf16.msra.mxu0 %v732
        %815 = vmatpush.bf16.msra.mxu0 %v728
        %816 = vmatpush.bf16.msra.mxu0 %v724
        %817 = vmatpush.bf16.msra.mxu0 %v720
        %818 = vmatpush.bf16.msra.mxu0 %v716
        %819 = vmatpush.bf16.msra.mxu0 %v712
        %820 = vmatmul.bf16.gmra.mxu0 %v570
        %v821 = vpop.f32.mrf.mxu0
        %v822 = vadd.f32 %v608, %v821
        %v823 = vpop.f32.mrf.mxu0
        %824 = vdwg.mxu0
        %825 = vst [vmem:[%s393] sm:$0xff] %v783
        %826 = vst [vmem:[%s393 + $0x8] sm:$0xff] %v796
        %827 = vst [vmem:[%s393 + $0x10] sm:$0xff] %v809
        %828 = vst [vmem:[%s393 + $0x18] sm:$0xff] %v822
        %s829 = sand.u32 %s210, 1
        %s830 = scalar_lea.sflag [#allocation5], %s829
        %s831 = sand.u32 %s210, 1
        %s832 = smul.addr %s831, 32
        %s833 = scalar_lea.vmem [#allocation12], %s832
        // Predicated region
        $region73: #{tpu_custom_call.1} parent=47 // pred_check
          %p834 = pneg %p220
        $region74: #{tpu_custom_call.1} parent=47 // pred_check_branch
          %836 = sbr.rel (%p834) target = $region76
        $region75: #{tpu_custom_call.1} parent=47 // pred_region
          %s837 = smul.u32 4, %s31
          %839 = vsyncadd %s830, 0
          %s840 = smul.addr %s30, 4
          %s841 = sadd.s32 %s837, %s840
          %s842 = smul.addr %s841, 8
          %s843 = scalar_lea.hbm %s7, %s842
          %s845 = sshll.u32 %s833, 4
          %s846 = int_to_ptr.vmem [resolvable:$true] %s845
          %s847 = sshll.u32 %s843, 4
          %s848 = int_to_ptr.hbm [resolvable:$true] %s847
          %850 = dma.vmem_to_hbm [thread:$0]  %s846, 512, %s848, %s830
        $region76: #{tpu_custom_call.1} parent=47 // pred_fallthru
          _
      $region48: #{tpu_custom_call.1} parent=5 // pred_fallthru
        _
      %p851 = scmp.le.s32.totalorder 2, %s21
      // Predicated region
      $region77: #{tpu_custom_call.1} parent=5 // pred_check
        %p852 = pneg %p851
      $region78: #{tpu_custom_call.1} parent=5 // pred_check_branch
        %854 = sbr.rel (%p852) target = $region80
      $region79: #{tpu_custom_call.1} parent=5 // pred_region
        %s855 = ssub.s32 %s21, 2
        // Predicated region
        $region81: #{tpu_custom_call.1} parent=79 // pred_check
          %p856 = pneg %p226
        $region82: #{tpu_custom_call.1} parent=79 // pred_check_branch
          %858 = sbr.rel (%p856) target = $region84
        $region83: #{tpu_custom_call.1} parent=79 // pred_region
          %s859 = sand.u32 %s211, 1
          %s860 = scalar_lea.sflag [#allocation5], %s859
          %s861 = sand.u32 %s211, 1
          %s862 = smul.addr %s861, 32
          %s863 = scalar_lea.vmem [#allocation12], %s862
          %865 = dma.done %s860, 512
        $region84: #{tpu_custom_call.1} parent=79 // pred_fallthru
          _
      $region80: #{tpu_custom_call.1} parent=5 // pred_fallthru
        _
    $region6: #{tpu_custom_call.1} parent=1 // loop_footer
      %s25 = sadd.s32 1, %s21
    $region7: #{tpu_custom_call.1} parent=1 // loop_footer_branch
      %20 = sbr.rel target = $region3
    $region8: #{tpu_custom_call.1} parent=1 // loop_exit
      _
    %866 = vsyncpa [#allocation4], 1
    %s867 = scalar_lea.sflag [#allocation4], 1
    %868 = vsyncpa %s867, 1
    %869 = vsyncpa [#allocation7], 1
    %870 = vsyncpa [#allocation10], 1
    %871 = vsyncpa [#allocation5], 1
    %s872 = scalar_lea.sflag [#allocation5], 1
    %873 = vsyncpa %s872, 1

</llo_original>
